<compile_context>
chip_gen: v5e
topology: v5e:2x2
jax: 0.10.0
libtpu: 0.0.40
codegen_flags: <defaults>
</compile_context>

<pallas_src>
import numpy as np
import jax
import jax.numpy as jnp
from jax.experimental import pallas as pl
from jax.experimental.pallas import tpu as pltpu

EPS = 1e-5


# ----------------------------------------------------------------------------
# Fused kernel factory (closes over static dims).
# Feature maps are 2-D: rows = (n, y), cols = (x, c)  [c fastest -> lanes].
# ----------------------------------------------------------------------------
def _make_fused_kernel(N, H, W, Cout, Ho, Wo):
    R, WC = N * H, W * Cout
    assert W & (W - 1) == 0, "BN lane roll-reduce assumes W is a power of two"
    f32, bf16 = jnp.float32, jnp.bfloat16

    def kernel(x3_ref, t_ref, wb1_ref, wb2_ref, wb4_ref, sh_ref, s4_ref,
               wl_ref, pv_ref, o_ref):
        # Packed per-channel row vectors: one (8, WC) load instead of 7 DMAs.
        pv = pv_ref[...]
        b1, b2, bl = pv[0:1, :], pv[1:2, :], pv[2:3, :]
        gamma, beta = pv[3:4, :], pv[4:5, :]
        b3 = pv[5:6, :Wo * Cout]

        def conv3x3(h, wb_ref):
            # +/-1 row shifts as tiny bf16 0/1 selection matmuls (bit-exact:
            # each output row is a single selected bf16 value), then ONE
            # K-stacked matmul (K = 3*W*Ci) with free in-MXU accumulation.
            hb = h.astype(bf16)
            up = jnp.dot(sh_ref[0], hb, preferred_element_type=f32).astype(bf16)
            dn = jnp.dot(sh_ref[1], hb, preferred_element_type=f32).astype(bf16)
            hcat = jnp.concatenate([up, hb, dn], axis=1)        # (R, 3*WCin)
            return jnp.dot(hcat, wb_ref[...], preferred_element_type=f32)

        def batchnorm(h):
            # Training-mode BN with batch statistics.  The per-channel reduce
            # over the W x-replicas is a log2(W)-step cyclic lane roll-and-add
            # on the XLU (direction-agnostic) -> no MXU, no (WC,WC) constant.
            m1 = jnp.mean(h, axis=0, keepdims=True)             # (1, WC)
            m2 = jnp.mean(h * h, axis=0, keepdims=True)         # (1, WC)
            s = Cout
            while s < WC:
                m1 = m1 + pltpu.roll(m1, s, axis=1)
                m2 = m2 + pltpu.roll(m2, s, axis=1)
                s *= 2
            mc = m1 * (1.0 / W)
            # TODO(synk): one-pass E[x^2]-mean^2 has cancellation risk at
            # production sizes; use a shifted-mean two-pass form there.
            vc = m2 * (1.0 / W) - mc * mc
            scale = gamma * jax.lax.rsqrt(vc + EPS)
            return h * scale + (beta - mc * scale)

        # ---- conv1 (3x3, pad 1): dy taps pre-stacked in the wrapper --------
        h = jnp.dot(x3_ref[...], wb1_ref[...], preferred_element_type=f32) + b1
        h = batchnorm(jnp.maximum(h, 0.0))

        # ---- time embedding: relu(Linear(t)); per-image masked VPU add -----
        te = jnp.maximum(
            jnp.dot(t_ref[...], wl_ref[...], preferred_element_type=f32) + bl,
            0.0)                                                # (N, WC)
        row = jax.lax.broadcasted_iota(jnp.int32, (R, WC), 0)
        for n in range(N):
            in_img = (row >= n * H) & (row < (n + 1) * H)
            h = h + jnp.where(in_img, te[n:n + 1, :], 0.0)

        # ---- conv2 (3x3, pad 1) + bias + ReLU + BN --------------------------
        h = batchnorm(jnp.maximum(conv3x3(h, wb2_ref) + b2, 0.0))

        # ---- transform: conv 4x4, stride 2, pad 1 ---------------------------
        # 4 tiny bf16 stride-2 row selections, lane-concat, ONE K=4*WC matmul.
        hb = h.astype(bf16)
        taps = [jnp.dot(s4_ref[dy], hb, preferred_element_type=f32).astype(bf16)
                for dy in range(4)]
        hcat = jnp.concatenate(taps, axis=1)                    # (N*Ho, 4*WC)
        o_ref[...] = jnp.dot(hcat, wb4_ref[...],
                             preferred_element_type=f32) + b3

    return kernel


# ----------------------------------------------------------------------------
# Compile-time constant helpers (numpy -> folded into the XLA program)
# ----------------------------------------------------------------------------
def _build_shift(N, H):
    """(2, N*H, N*H) 0/1 matrices selecting row r-1 / r+1 within each image."""
    R = N * H
    r = np.arange(R)[:, None]
    c = np.arange(R)[None, :]
    y = r % H
    up = ((c == r - 1) & (y >= 1)).astype(np.float32)          # dy = 0 taps
    dn = ((c == r + 1) & (y <= H - 2)).astype(np.float32)      # dy = 2 taps
    return np.stack([up, dn])


def _build_s4(N, H, Ho):
    """(4, N*Ho, N*H) 0/1 matrices selecting input row 2*yo + dy - 1 (masked)."""
    ro = np.arange(N * Ho)[:, None]
    ri = np.arange(N * H)[None, :]
    n, yl = ro // Ho, ro % Ho
    s = np.zeros((4, N * Ho, N * H), np.float32)
    for dy in range(4):
        yin = 2 * yl + dy - 1
        valid = (yin >= 0) & (yin < H)
        s[dy] = ((ri == n * H + yin) & valid).astype(np.float32)
    return s


# ----------------------------------------------------------------------------
# K-stacked banded conv weights (traced; built from params once per call)
# ----------------------------------------------------------------------------
def _banded_3x3_stacked(w, W):
    """w: (3,3,Ci,Co) HWIO -> (3*W*Ci, W*Co); dy blocks stacked along K,
    dx taps + width pad=1 folded into the band structure."""
    xin = np.arange(W)[:, None]
    xo = np.arange(W)[None, :]
    dx = xin - xo + 1
    valid = (dx >= 0) & (dx < 3)
    dxc = np.clip(dx, 0, 2)
    wsel = w[:, dxc]                                    # (3, W, W, Ci, Co)
    wsel = jnp.where(valid[None, :, :, None, None], wsel, 0.0)
    wsel = jnp.transpose(wsel, (0, 1, 3, 2, 4))         # (3, Win, Ci, Wout, Co)
    Ci, Co = w.shape[2], w.shape[3]
    return wsel.reshape(3 * W * Ci, W * Co)


def _banded_4x4_s2_stacked(w, W, Wo):
    """w: (4,4,Ci,Co) HWIO -> (4*W*Ci, Wo*Co); stride-2 dx taps + pad=1."""
    xin = np.arange(W)[:, None]
    xo = np.arange(Wo)[None, :]
    dx = xin - 2 * xo + 1
    valid = (dx >= 0) & (dx < 4)
    dxc = np.clip(dx, 0, 3)
    wsel = w[:, dxc]                                    # (4, W, Wo, Ci, Co)
    wsel = jnp.where(valid[None, :, :, None, None], wsel, 0.0)
    wsel = jnp.transpose(wsel, (0, 1, 3, 2, 4))         # (4, Win, Ci, Wout, Co)
    Ci, Co = w.shape[2], w.shape[3]
    return wsel.reshape(4 * W * Ci, Wo * Co)


# ----------------------------------------------------------------------------
# Wrapper
# ----------------------------------------------------------------------------
@jax.jit
def block_forward(x_nchw, t, p):
    f32, bf16 = jnp.float32, jnp.bfloat16
    x = jnp.transpose(x_nchw, (0, 2, 3, 1)).astype(f32)        # NCHW -> NHWC
    N, H, W, Cin = x.shape
    Cout = p["b1"].shape[-1]
    Ho = (H + 2 - 4) // 2 + 1
    Wo = (W + 2 - 4) // 2 + 1
    WC = W * Cout

    # conv1's dy taps stacked along K in the wrapper (pure layout plumbing):
    xu = jnp.pad(x, ((0, 0), (1, 0), (0, 0), (0, 0)))[:, :H]   # row y-1 (0 at y=0)
    xd = jnp.pad(x, ((0, 0), (0, 1), (0, 0), (0, 0)))[:, 1:]   # row y+1 (0 at y=H-1)
    to2 = lambda a: a.reshape(N * H, W * Cin)
    x3 = jnp.concatenate([to2(xu), to2(x), to2(xd)], axis=1).astype(bf16)

    # K-stacked banded conv weights (bf16 for the MXU; f32 accumulation inside).
    wb1 = _banded_3x3_stacked(p["w1"], W).astype(bf16)          # (3*W*Cin,  W*Cout)
    wb2 = _banded_3x3_stacked(p["w2"], W).astype(bf16)          # (3*W*Cout, W*Cout)
    wb4 = _banded_4x4_s2_stacked(p["w3"], W, Wo).astype(bf16)   # (4*W*Cout, Wo*Cout)

    # 0/1 selection matrices, shipped bf16 (exact; half the DMA bytes).
    sh = jnp.asarray(_build_shift(N, H), bf16)                  # (2, N*H, N*H)
    s4 = jnp.asarray(_build_s4(N, H, Ho), bf16)                 # (4, N*Ho, N*H)

    # Linear weight replicated across x -> lane-dense (t_dim, W*Cout).
    wl_rep = jnp.tile(p["wl"].astype(f32), (1, W))

    # Pack all per-channel (1, W*Cout) rows into ONE (8, W*Cout) array -> 1 DMA.
    rep = lambda v, r: jnp.tile(v.astype(f32).reshape(1, -1), (1, r))[0]
    pv = jnp.zeros((8, WC), f32)
    pv = pv.at[0, :].set(rep(p["b1"], W))
    pv = pv.at[1, :].set(rep(p["b2"], W))
    pv = pv.at[2, :].set(rep(p["bl"], W))
    pv = pv.at[3, :].set(rep(p["gamma"], W))
    pv = pv.at[4, :].set(rep(p["beta"], W))
    pv = pv.at[5, :Wo * Cout].set(rep(p["b3"], Wo))

    vm = pl.BlockSpec(memory_space=pltpu.MemorySpace.VMEM)
    out2 = pl.pallas_call(
        _make_fused_kernel(N, H, W, Cout, Ho, Wo),
        out_shape=jax.ShapeDtypeStruct((N * Ho, Wo * Cout), f32),
        in_specs=[vm] * 9,
        out_specs=vm,
    )(x3, t.astype(f32), wb1, wb2, wb4, sh, s4, wl_rep, pv)

    y = out2.reshape(N, Ho, Wo, Cout)
    return jnp.transpose(y, (0, 3, 1, 2))                       # NHWC -> NCHW


# ----------------------------------------------------------------------------
# Deterministic parameter init (HWIO conv weights, (in,out) linear weight)
# ----------------------------------------------------------------------------
def init_params(key, in_ch, out_ch, t_dim):
    ks = jax.random.split(key, 8)
    r = lambda k, s: 0.1 * jax.random.normal(k, s, jnp.float32)
    return dict(
        w1=r(ks[0], (3, 3, in_ch, out_ch)),  b1=r(ks[1], (1, out_ch)),
        wl=r(ks[2], (t_dim, out_ch)),        bl=r(ks[3], (1, out_ch)),
        w2=r(ks[4], (3, 3, out_ch, out_ch)), b2=r(ks[5], (1, out_ch)),
        w3=r(ks[6], (4, 4, out_ch, out_ch)), b3=r(ks[7], (1, out_ch)),
        gamma=jnp.ones((1, out_ch), jnp.float32),
        beta=jnp.zeros((1, out_ch), jnp.float32),
    )


# Pure-JAX reference (sanity check only; f32 HIGHEST precision)
def ref_forward(x_nchw, t, p):
    x = jnp.transpose(x_nchw, (0, 2, 3, 1))
    dn = ("NHWC", "HWIO", "NHWC")
    hp = jax.lax.Precision.HIGHEST

    def bn(h):
        m = jnp.mean(h, axis=(0, 1, 2), keepdims=True)
        v = jnp.mean((h - m) ** 2, axis=(0, 1, 2), keepdims=True)
        return ((h - m) / jnp.sqrt(v + EPS) * p["gamma"].reshape(1, 1, 1, -1)
                + p["beta"].reshape(1, 1, 1, -1))

    h = jax.lax.conv_general_dilated(x, p["w1"], (1, 1), [(1, 1), (1, 1)],
                                     dimension_numbers=dn, precision=hp)
    h = bn(jnp.maximum(h + p["b1"].reshape(1, 1, 1, -1), 0.0))
    te = jnp.maximum(jnp.dot(t, p["wl"], precision=hp) + p["bl"], 0.0)
    h = h + te[:, None, None, :]
    h = jax.lax.conv_general_dilated(h, p["w2"], (1, 1), [(1, 1), (1, 1)],
                                     dimension_numbers=dn, precision=hp)
    h = bn(jnp.maximum(h + p["b2"].reshape(1, 1, 1, -1), 0.0))
    y = jax.lax.conv_general_dilated(h, p["w3"], (2, 2), [(1, 1), (1, 1)],
                                     dimension_numbers=dn, precision=hp)
    y = y + p["b3"].reshape(1, 1, 1, -1)
    return jnp.transpose(y, (0, 3, 1, 2))


if __name__ == "__main__":
    in_ch, out_ch, t_dim = 4, 8, 32
    key = jax.random.PRNGKey(0)
    kx, kt, kp = jax.random.split(key, 3)
    x = jax.random.normal(kx, (2, in_ch, 16, 16), jnp.float32)   # NCHW like PyTorch
    t = jax.random.normal(kt, (2, t_dim), jnp.float32)
    params = init_params(kp, in_ch, out_ch, t_dim)

    out = jax.block_until_ready(block_forward(x, t, params))
    assert out.shape == (2, out_ch, 8, 8), out.shape

    ref = ref_forward(x, t, params)
    err = float(jnp.max(jnp.abs(out - ref)))
    # bf16 MXU inputs (f32 accumulation) -> slightly looser tolerance than all-f32.
    if err < 7e-2:
        print("KERNEL_OK")
    else:
        raise SystemExit(f"mismatch: max abs err {err}")
</pallas_src>

<mosaic_0001>
module attributes {stable_mosaic.version = 11 : i64} {
  func.func @kernel(%arg0: memref<32x192xbf16, #tpu.memory_space<vmem>>, %arg1: memref<2x32xf32, #tpu.memory_space<vmem>>, %arg2: memref<192x128xbf16, #tpu.memory_space<vmem>>, %arg3: memref<384x128xbf16, #tpu.memory_space<vmem>>, %arg4: memref<512x64xbf16, #tpu.memory_space<vmem>>, %arg5: memref<2x32x32xbf16, #tpu.memory_space<vmem>>, %arg6: memref<4x16x32xbf16, #tpu.memory_space<vmem>>, %arg7: memref<32x128xf32, #tpu.memory_space<vmem>>, %arg8: memref<8x128xf32, #tpu.memory_space<vmem>>, %arg9: memref<16x64xf32, #tpu.memory_space<vmem>>) attributes {dimension_semantics = [], scalar_prefetch = 0 : i64, scratch_operands = 0 : i64, tpu.core_type = #tpu.core_type<tc>} {
    %c0 = arith.constant 0 : index
    %c0_0 = arith.constant 0 : index
    %0 = vector.load %arg8[%c0, %c0_0] : memref<8x128xf32, #tpu.memory_space<vmem>>, vector<8x128xf32>
    %1 = vector.extract_strided_slice %0 {offsets = [0, 0], sizes = [1, 128], strides = [1, 1]} : vector<8x128xf32> to vector<1x128xf32>
    %2 = vector.extract_strided_slice %0 {offsets = [1, 0], sizes = [1, 128], strides = [1, 1]} : vector<8x128xf32> to vector<1x128xf32>
    %3 = vector.extract_strided_slice %0 {offsets = [2, 0], sizes = [1, 128], strides = [1, 1]} : vector<8x128xf32> to vector<1x128xf32>
    %4 = vector.extract_strided_slice %0 {offsets = [3, 0], sizes = [1, 128], strides = [1, 1]} : vector<8x128xf32> to vector<1x128xf32>
    %5 = vector.extract_strided_slice %0 {offsets = [4, 0], sizes = [1, 128], strides = [1, 1]} : vector<8x128xf32> to vector<1x128xf32>
    %6 = vector.extract_strided_slice %0 {offsets = [5, 0], sizes = [1, 64], strides = [1, 1]} : vector<8x128xf32> to vector<1x64xf32>
    %c0_1 = arith.constant 0 : index
    %c0_2 = arith.constant 0 : index
    %7 = vector.load %arg0[%c0_1, %c0_2] : memref<32x192xbf16, #tpu.memory_space<vmem>>, vector<32x192xbf16>
    %c0_3 = arith.constant 0 : index
    %c0_4 = arith.constant 0 : index
    %8 = vector.load %arg2[%c0_3, %c0_4] : memref<192x128xbf16, #tpu.memory_space<vmem>>, vector<192x128xbf16>
    %cst = arith.constant dense<0.000000e+00> : vector<32x128xf32>
    %9 = tpu.matmul %7, %8, %cst {dimension_numbers = #tpu.dot_dimension_numbers<[1], [0], [0], [1], [0, 0, 1, 1], [], []>} : vector<32x192xbf16>, vector<192x128xbf16>, vector<32x128xf32> -> vector<32x128xf32>
    %10 = vector.broadcast %1 : vector<1x128xf32> to vector<32x128xf32>
    %11 = arith.addf %9, %10 : vector<32x128xf32>
    %cst_5 = arith.constant 0.000000e+00 : f32
    %12 = vector.broadcast %cst_5 : f32 to vector<32x128xf32>
    %13 = arith.maximumf %11, %12 : vector<32x128xf32>
    %cst_6 = arith.constant dense<0.000000e+00> : vector<128xf32>
    %14 = vector.multi_reduction <add>, %13, %cst_6 [0] : vector<32x128xf32> to vector<128xf32>
    %15 = vector.shape_cast %14 : vector<128xf32> to vector<1x128xf32>
    %cst_7 = arith.constant 3.200000e+01 : f32
    %16 = vector.broadcast %cst_7 : f32 to vector<1x128xf32>
    %17 = arith.divf %15, %16 : vector<1x128xf32>
    %18 = arith.mulf %13, %13 : vector<32x128xf32>
    %cst_8 = arith.constant dense<0.000000e+00> : vector<128xf32>
    %19 = vector.multi_reduction <add>, %18, %cst_8 [0] : vector<32x128xf32> to vector<128xf32>
    %20 = vector.shape_cast %19 : vector<128xf32> to vector<1x128xf32>
    %cst_9 = arith.constant 3.200000e+01 : f32
    %21 = vector.broadcast %cst_9 : f32 to vector<1x128xf32>
    %22 = arith.divf %20, %21 : vector<1x128xf32>
    %c8_i32 = arith.constant 8 : i32
    %23 = tpu.dynamic_rotate %17 by %c8_i32 dim 1 : vector<1x128xf32>, i32 -> vector<1x128xf32>
    %24 = arith.addf %17, %23 : vector<1x128xf32>
    %c8_i32_10 = arith.constant 8 : i32
    %25 = tpu.dynamic_rotate %22 by %c8_i32_10 dim 1 : vector<1x128xf32>, i32 -> vector<1x128xf32>
    %26 = arith.addf %22, %25 : vector<1x128xf32>
    %c16_i32 = arith.constant 16 : i32
    %27 = tpu.dynamic_rotate %24 by %c16_i32 dim 1 : vector<1x128xf32>, i32 -> vector<1x128xf32>
    %28 = arith.addf %24, %27 : vector<1x128xf32>
    %c16_i32_11 = arith.constant 16 : i32
    %29 = tpu.dynamic_rotate %26 by %c16_i32_11 dim 1 : vector<1x128xf32>, i32 -> vector<1x128xf32>
    %30 = arith.addf %26, %29 : vector<1x128xf32>
    %c32_i32 = arith.constant 32 : i32
    %31 = tpu.dynamic_rotate %28 by %c32_i32 dim 1 : vector<1x128xf32>, i32 -> vector<1x128xf32>
    %32 = arith.addf %28, %31 : vector<1x128xf32>
    %c32_i32_12 = arith.constant 32 : i32
    %33 = tpu.dynamic_rotate %30 by %c32_i32_12 dim 1 : vector<1x128xf32>, i32 -> vector<1x128xf32>
    %34 = arith.addf %30, %33 : vector<1x128xf32>
    %c64_i32 = arith.constant 64 : i32
    %35 = tpu.dynamic_rotate %32 by %c64_i32 dim 1 : vector<1x128xf32>, i32 -> vector<1x128xf32>
    %36 = arith.addf %32, %35 : vector<1x128xf32>
    %c64_i32_13 = arith.constant 64 : i32
    %37 = tpu.dynamic_rotate %34 by %c64_i32_13 dim 1 : vector<1x128xf32>, i32 -> vector<1x128xf32>
    %38 = arith.addf %34, %37 : vector<1x128xf32>
    %cst_14 = arith.constant 6.250000e-02 : f32
    %39 = vector.broadcast %cst_14 : f32 to vector<1x128xf32>
    %40 = arith.mulf %36, %39 : vector<1x128xf32>
    %cst_15 = arith.constant 6.250000e-02 : f32
    %41 = vector.broadcast %cst_15 : f32 to vector<1x128xf32>
    %42 = arith.mulf %38, %41 : vector<1x128xf32>
    %43 = arith.mulf %40, %40 : vector<1x128xf32>
    %44 = arith.subf %42, %43 : vector<1x128xf32>
    %cst_16 = arith.constant 9.99999974E-6 : f32
    %45 = vector.broadcast %cst_16 : f32 to vector<1x128xf32>
    %46 = arith.addf %44, %45 : vector<1x128xf32>
    %47 = math.rsqrt %46 : vector<1x128xf32>
    %48 = arith.mulf %4, %47 : vector<1x128xf32>
    %49 = vector.broadcast %48 : vector<1x128xf32> to vector<32x128xf32>
    %50 = arith.mulf %13, %49 : vector<32x128xf32>
    %51 = arith.mulf %40, %48 : vector<1x128xf32>
    %52 = arith.subf %5, %51 : vector<1x128xf32>
    %53 = vector.broadcast %52 : vector<1x128xf32> to vector<32x128xf32>
    %54 = arith.addf %50, %53 : vector<32x128xf32>
    %c0_17 = arith.constant 0 : index
    %c0_18 = arith.constant 0 : index
    %55 = vector.load %arg1[%c0_17, %c0_18] : memref<2x32xf32, #tpu.memory_space<vmem>>, vector<2x32xf32>
    %c0_19 = arith.constant 0 : index
    %c0_20 = arith.constant 0 : index
    %56 = vector.load %arg7[%c0_19, %c0_20] : memref<32x128xf32, #tpu.memory_space<vmem>>, vector<32x128xf32>
    %cst_21 = arith.constant dense<0.000000e+00> : vector<2x128xf32>
    %57 = tpu.matmul %55, %56, %cst_21 {dimension_numbers = #tpu.dot_dimension_numbers<[1], [0], [0], [1], [0, 0, 1, 1], [], []>} : vector<2x32xf32>, vector<32x128xf32>, vector<2x128xf32> -> vector<2x128xf32>
    %58 = vector.broadcast %3 : vector<1x128xf32> to vector<2x128xf32>
    %59 = arith.addf %57, %58 : vector<2x128xf32>
    %cst_22 = arith.constant 0.000000e+00 : f32
    %60 = vector.broadcast %cst_22 : f32 to vector<2x128xf32>
    %61 = arith.maximumf %59, %60 : vector<2x128xf32>
    %62 = tpu.iota {dimensions = array<i32: 0>} : vector<32x128xi32>
    %c0_i32 = arith.constant 0 : i32
    %63 = vector.broadcast %c0_i32 : i32 to vector<32x128xi32>
    %64 = arith.cmpi sge, %62, %63 : vector<32x128xi32>
    %c16_i32_23 = arith.constant 16 : i32
    %65 = vector.broadcast %c16_i32_23 : i32 to vector<32x128xi32>
    %66 = arith.cmpi slt, %62, %65 : vector<32x128xi32>
    %67 = arith.andi %64, %66 : vector<32x128xi1>
    %68 = vector.extract_strided_slice %61 {offsets = [0, 0], sizes = [1, 128], strides = [1, 1]} : vector<2x128xf32> to vector<1x128xf32>
    %cst_24 = arith.constant 0.000000e+00 : f32
    %69 = vector.shape_cast %68 : vector<1x128xf32> to vector<1x128xf32>
    %70 = vector.broadcast %69 : vector<1x128xf32> to vector<32x128xf32>
    %71 = vector.broadcast %cst_24 : f32 to vector<32x128xf32>
    %72 = arith.select %67, %70, %71 : vector<32x128xi1>, vector<32x128xf32>
    %73 = arith.addf %54, %72 : vector<32x128xf32>
    %c16_i32_25 = arith.constant 16 : i32
    %74 = vector.broadcast %c16_i32_25 : i32 to vector<32x128xi32>
    %75 = arith.cmpi sge, %62, %74 : vector<32x128xi32>
    %c32_i32_26 = arith.constant 32 : i32
    %76 = vector.broadcast %c32_i32_26 : i32 to vector<32x128xi32>
    %77 = arith.cmpi slt, %62, %76 : vector<32x128xi32>
    %78 = arith.andi %75, %77 : vector<32x128xi1>
    %79 = vector.extract_strided_slice %61 {offsets = [1, 0], sizes = [1, 128], strides = [1, 1]} : vector<2x128xf32> to vector<1x128xf32>
    %cst_27 = arith.constant 0.000000e+00 : f32
    %80 = vector.shape_cast %79 : vector<1x128xf32> to vector<1x128xf32>
    %81 = vector.broadcast %80 : vector<1x128xf32> to vector<32x128xf32>
    %82 = vector.broadcast %cst_27 : f32 to vector<32x128xf32>
    %83 = arith.select %78, %81, %82 : vector<32x128xi1>, vector<32x128xf32>
    %84 = arith.addf %73, %83 : vector<32x128xf32>
    %85 = arith.truncf %84 : vector<32x128xf32> to vector<32x128xbf16>
    %c0_28 = arith.constant 0 : index
    %c0_29 = arith.constant 0 : index
    %c0_30 = arith.constant 0 : index
    %86 = vector.load %arg5[%c0_28, %c0_29, %c0_30] : memref<2x32x32xbf16, #tpu.memory_space<vmem>>, vector<1x32x32xbf16>
    %87 = vector.shape_cast %86 : vector<1x32x32xbf16> to vector<32x32xbf16>
    %cst_31 = arith.constant dense<0.000000e+00> : vector<32x128xf32>
    %88 = tpu.matmul %87, %85, %cst_31 {dimension_numbers = #tpu.dot_dimension_numbers<[1], [0], [0], [1], [0, 0, 1, 1], [], []>} : vector<32x32xbf16>, vector<32x128xbf16>, vector<32x128xf32> -> vector<32x128xf32>
    %89 = arith.truncf %88 : vector<32x128xf32> to vector<32x128xbf16>
    %c1 = arith.constant 1 : index
    %c0_32 = arith.constant 0 : index
    %c0_33 = arith.constant 0 : index
    %90 = vector.load %arg5[%c1, %c0_32, %c0_33] : memref<2x32x32xbf16, #tpu.memory_space<vmem>>, vector<1x32x32xbf16>
    %91 = vector.shape_cast %90 : vector<1x32x32xbf16> to vector<32x32xbf16>
    %cst_34 = arith.constant dense<0.000000e+00> : vector<32x128xf32>
    %92 = tpu.matmul %91, %85, %cst_34 {dimension_numbers = #tpu.dot_dimension_numbers<[1], [0], [0], [1], [0, 0, 1, 1], [], []>} : vector<32x32xbf16>, vector<32x128xbf16>, vector<32x128xf32> -> vector<32x128xf32>
    %93 = arith.truncf %92 : vector<32x128xf32> to vector<32x128xbf16>
    %94 = tpu.concatenate %89, %85, %93 in 1 : vector<32x128xbf16>, vector<32x128xbf16>, vector<32x128xbf16> -> vector<32x384xbf16>
    %c0_35 = arith.constant 0 : index
    %c0_36 = arith.constant 0 : index
    %95 = vector.load %arg3[%c0_35, %c0_36] : memref<384x128xbf16, #tpu.memory_space<vmem>>, vector<384x128xbf16>
    %cst_37 = arith.constant dense<0.000000e+00> : vector<32x128xf32>
    %96 = tpu.matmul %94, %95, %cst_37 {dimension_numbers = #tpu.dot_dimension_numbers<[1], [0], [0], [1], [0, 0, 1, 1], [], []>} : vector<32x384xbf16>, vector<384x128xbf16>, vector<32x128xf32> -> vector<32x128xf32>
    %97 = vector.broadcast %2 : vector<1x128xf32> to vector<32x128xf32>
    %98 = arith.addf %96, %97 : vector<32x128xf32>
    %cst_38 = arith.constant 0.000000e+00 : f32
    %99 = vector.broadcast %cst_38 : f32 to vector<32x128xf32>
    %100 = arith.maximumf %98, %99 : vector<32x128xf32>
    %cst_39 = arith.constant dense<0.000000e+00> : vector<128xf32>
    %101 = vector.multi_reduction <add>, %100, %cst_39 [0] : vector<32x128xf32> to vector<128xf32>
    %102 = vector.shape_cast %101 : vector<128xf32> to vector<1x128xf32>
    %cst_40 = arith.constant 3.200000e+01 : f32
    %103 = vector.broadcast %cst_40 : f32 to vector<1x128xf32>
    %104 = arith.divf %102, %103 : vector<1x128xf32>
    %105 = arith.mulf %100, %100 : vector<32x128xf32>
    %cst_41 = arith.constant dense<0.000000e+00> : vector<128xf32>
    %106 = vector.multi_reduction <add>, %105, %cst_41 [0] : vector<32x128xf32> to vector<128xf32>
    %107 = vector.shape_cast %106 : vector<128xf32> to vector<1x128xf32>
    %cst_42 = arith.constant 3.200000e+01 : f32
    %108 = vector.broadcast %cst_42 : f32 to vector<1x128xf32>
    %109 = arith.divf %107, %108 : vector<1x128xf32>
    %c8_i32_43 = arith.constant 8 : i32
    %110 = tpu.dynamic_rotate %104 by %c8_i32_43 dim 1 : vector<1x128xf32>, i32 -> vector<1x128xf32>
    %111 = arith.addf %104, %110 : vector<1x128xf32>
    %c8_i32_44 = arith.constant 8 : i32
    %112 = tpu.dynamic_rotate %109 by %c8_i32_44 dim 1 : vector<1x128xf32>, i32 -> vector<1x128xf32>
    %113 = arith.addf %109, %112 : vector<1x128xf32>
    %c16_i32_45 = arith.constant 16 : i32
    %114 = tpu.dynamic_rotate %111 by %c16_i32_45 dim 1 : vector<1x128xf32>, i32 -> vector<1x128xf32>
    %115 = arith.addf %111, %114 : vector<1x128xf32>
    %c16_i32_46 = arith.constant 16 : i32
    %116 = tpu.dynamic_rotate %113 by %c16_i32_46 dim 1 : vector<1x128xf32>, i32 -> vector<1x128xf32>
    %117 = arith.addf %113, %116 : vector<1x128xf32>
    %c32_i32_47 = arith.constant 32 : i32
    %118 = tpu.dynamic_rotate %115 by %c32_i32_47 dim 1 : vector<1x128xf32>, i32 -> vector<1x128xf32>
    %119 = arith.addf %115, %118 : vector<1x128xf32>
    %c32_i32_48 = arith.constant 32 : i32
    %120 = tpu.dynamic_rotate %117 by %c32_i32_48 dim 1 : vector<1x128xf32>, i32 -> vector<1x128xf32>
    %121 = arith.addf %117, %120 : vector<1x128xf32>
    %c64_i32_49 = arith.constant 64 : i32
    %122 = tpu.dynamic_rotate %119 by %c64_i32_49 dim 1 : vector<1x128xf32>, i32 -> vector<1x128xf32>
    %123 = arith.addf %119, %122 : vector<1x128xf32>
    %c64_i32_50 = arith.constant 64 : i32
    %124 = tpu.dynamic_rotate %121 by %c64_i32_50 dim 1 : vector<1x128xf32>, i32 -> vector<1x128xf32>
    %125 = arith.addf %121, %124 : vector<1x128xf32>
    %cst_51 = arith.constant 6.250000e-02 : f32
    %126 = vector.broadcast %cst_51 : f32 to vector<1x128xf32>
    %127 = arith.mulf %123, %126 : vector<1x128xf32>
    %cst_52 = arith.constant 6.250000e-02 : f32
    %128 = vector.broadcast %cst_52 : f32 to vector<1x128xf32>
    %129 = arith.mulf %125, %128 : vector<1x128xf32>
    %130 = arith.mulf %127, %127 : vector<1x128xf32>
    %131 = arith.subf %129, %130 : vector<1x128xf32>
    %cst_53 = arith.constant 9.99999974E-6 : f32
    %132 = vector.broadcast %cst_53 : f32 to vector<1x128xf32>
    %133 = arith.addf %131, %132 : vector<1x128xf32>
    %134 = math.rsqrt %133 : vector<1x128xf32>
    %135 = arith.mulf %4, %134 : vector<1x128xf32>
    %136 = vector.broadcast %135 : vector<1x128xf32> to vector<32x128xf32>
    %137 = arith.mulf %100, %136 : vector<32x128xf32>
    %138 = arith.mulf %127, %135 : vector<1x128xf32>
    %139 = arith.subf %5, %138 : vector<1x128xf32>
    %140 = vector.broadcast %139 : vector<1x128xf32> to vector<32x128xf32>
    %141 = arith.addf %137, %140 : vector<32x128xf32>
    %142 = arith.truncf %141 : vector<32x128xf32> to vector<32x128xbf16>
    %c0_54 = arith.constant 0 : index
    %c0_55 = arith.constant 0 : index
    %c0_56 = arith.constant 0 : index
    %143 = vector.load %arg6[%c0_54, %c0_55, %c0_56] : memref<4x16x32xbf16, #tpu.memory_space<vmem>>, vector<1x16x32xbf16>
    %144 = vector.shape_cast %143 : vector<1x16x32xbf16> to vector<16x32xbf16>
    %cst_57 = arith.constant dense<0.000000e+00> : vector<16x128xf32>
    %145 = tpu.matmul %144, %142, %cst_57 {dimension_numbers = #tpu.dot_dimension_numbers<[1], [0], [0], [1], [0, 0, 1, 1], [], []>} : vector<16x32xbf16>, vector<32x128xbf16>, vector<16x128xf32> -> vector<16x128xf32>
    %146 = arith.truncf %145 : vector<16x128xf32> to vector<16x128xbf16>
    %c1_58 = arith.constant 1 : index
    %c0_59 = arith.constant 0 : index
    %c0_60 = arith.constant 0 : index
    %147 = vector.load %arg6[%c1_58, %c0_59, %c0_60] : memref<4x16x32xbf16, #tpu.memory_space<vmem>>, vector<1x16x32xbf16>
    %148 = vector.shape_cast %147 : vector<1x16x32xbf16> to vector<16x32xbf16>
    %cst_61 = arith.constant dense<0.000000e+00> : vector<16x128xf32>
    %149 = tpu.matmul %148, %142, %cst_61 {dimension_numbers = #tpu.dot_dimension_numbers<[1], [0], [0], [1], [0, 0, 1, 1], [], []>} : vector<16x32xbf16>, vector<32x128xbf16>, vector<16x128xf32> -> vector<16x128xf32>
    %150 = arith.truncf %149 : vector<16x128xf32> to vector<16x128xbf16>
    %c2 = arith.constant 2 : index
    %c0_62 = arith.constant 0 : index
    %c0_63 = arith.constant 0 : index
    %151 = vector.load %arg6[%c2, %c0_62, %c0_63] : memref<4x16x32xbf16, #tpu.memory_space<vmem>>, vector<1x16x32xbf16>
    %152 = vector.shape_cast %151 : vector<1x16x32xbf16> to vector<16x32xbf16>
    %cst_64 = arith.constant dense<0.000000e+00> : vector<16x128xf32>
    %153 = tpu.matmul %152, %142, %cst_64 {dimension_numbers = #tpu.dot_dimension_numbers<[1], [0], [0], [1], [0, 0, 1, 1], [], []>} : vector<16x32xbf16>, vector<32x128xbf16>, vector<16x128xf32> -> vector<16x128xf32>
    %154 = arith.truncf %153 : vector<16x128xf32> to vector<16x128xbf16>
    %c3 = arith.constant 3 : index
    %c0_65 = arith.constant 0 : index
    %c0_66 = arith.constant 0 : index
    %155 = vector.load %arg6[%c3, %c0_65, %c0_66] : memref<4x16x32xbf16, #tpu.memory_space<vmem>>, vector<1x16x32xbf16>
    %156 = vector.shape_cast %155 : vector<1x16x32xbf16> to vector<16x32xbf16>
    %cst_67 = arith.constant dense<0.000000e+00> : vector<16x128xf32>
    %157 = tpu.matmul %156, %142, %cst_67 {dimension_numbers = #tpu.dot_dimension_numbers<[1], [0], [0], [1], [0, 0, 1, 1], [], []>} : vector<16x32xbf16>, vector<32x128xbf16>, vector<16x128xf32> -> vector<16x128xf32>
    %158 = arith.truncf %157 : vector<16x128xf32> to vector<16x128xbf16>
    %159 = tpu.concatenate %146, %150, %154, %158 in 1 : vector<16x128xbf16>, vector<16x128xbf16>, vector<16x128xbf16>, vector<16x128xbf16> -> vector<16x512xbf16>
    %c0_68 = arith.constant 0 : index
    %c0_69 = arith.constant 0 : index
    %160 = vector.load %arg4[%c0_68, %c0_69] : memref<512x64xbf16, #tpu.memory_space<vmem>>, vector<512x64xbf16>
    %cst_70 = arith.constant dense<0.000000e+00> : vector<16x64xf32>
    %161 = tpu.matmul %159, %160, %cst_70 {dimension_numbers = #tpu.dot_dimension_numbers<[1], [0], [0], [1], [0, 0, 1, 1], [], []>} : vector<16x512xbf16>, vector<512x64xbf16>, vector<16x64xf32> -> vector<16x64xf32>
    %162 = vector.broadcast %6 : vector<1x64xf32> to vector<16x64xf32>
    %163 = arith.addf %161, %162 : vector<16x64xf32>
    %c0_71 = arith.constant 0 : index
    %c0_72 = arith.constant 0 : index
    %164 = vector.load %arg9[%c0_71, %c0_72] : memref<16x64xf32, #tpu.memory_space<vmem>>, vector<16x64xf32>
    tpu.vector_store %arg9[%c0_71, %c0_72], %163 {strides = array<i32>} : memref<16x64xf32, #tpu.memory_space<vmem>>, vector<16x64xf32>,
    return
  }
}

</mosaic_0001>

<llo_original>
// kernel: block_forward.1
$region0: #{block_forward.1}
  #allocation0 [shape = 'u32[]', space=smem, size = 0x4, offset = 0x4, fixed_abs, tag = 'smem constant byte address 0x4 - core index']
  #allocation1 [shape = 'u32[72,128]{1,0:T(1,128)}', space=vmem, size = 0x9000, scoped, tag = 'internal scratch']
  %s0 = inlined_call_operand.vmem [shape: bf16[32,192], index: 0, kind: input, shape index: {}]
  %s1 = inlined_call_operand.vmem [shape: f32[2,32], index: 1, kind: input, shape index: {}]
  %s2 = inlined_call_operand.vmem [shape: bf16[192,128], index: 2, kind: input, shape index: {}]
  %s3 = inlined_call_operand.vmem [shape: bf16[384,128], index: 3, kind: input, shape index: {}]
  %s4 = inlined_call_operand.vmem [shape: bf16[512,64], index: 4, kind: input, shape index: {}]
  %s5 = inlined_call_operand.vmem [shape: bf16[2,32,32], index: 5, kind: input, shape index: {}]
  %s6 = inlined_call_operand.vmem [shape: bf16[4,16,32], index: 6, kind: input, shape index: {}]
  %s7 = inlined_call_operand.vmem [shape: f32[32,128], index: 7, kind: input, shape index: {}]
  %s8 = inlined_call_operand.vmem [shape: f32[8,128], index: 8, kind: input, shape index: {}]
  %s9 = inlined_call_operand.vmem [shape: f32[16,64], index: 9, kind: output, shape index: {}]
  %s10 = sld [smem:[#allocation0]]
  $region46: #{block_forward.1} parent=0
    _
  %s12 = ssub.s32 1, %s10
  %s13 = scalar_select 0, %s12, %s10
  // Predicated region
  $region2: #{block_forward.1} parent=0 // pred_check
    _
  $region3: #{block_forward.1} parent=0 // pred_check_branch
    %15 = sbr.rel (0) target = $region5
  $region4: #{block_forward.1} parent=0 // pred_region
    _
  $region5: #{block_forward.1} parent=0 // pred_fallthru
    _
  // Predicated region
  $region6: #{block_forward.1} parent=0 // pred_check
    _
  $region7: #{block_forward.1} parent=0 // pred_check_branch
    %17 = sbr.rel (0) target = $region9
  $region8: #{block_forward.1} parent=0 // pred_region
    _
  $region9: #{block_forward.1} parent=0 // pred_fallthru
    _
  // Predicated region
  $region10: #{block_forward.1} parent=0 // pred_check
    _
  $region11: #{block_forward.1} parent=0 // pred_check_branch
    %19 = sbr.rel (0) target = $region13
  $region12: #{block_forward.1} parent=0 // pred_region
    _
  $region13: #{block_forward.1} parent=0 // pred_fallthru
    _
  // Predicated region
  $region14: #{block_forward.1} parent=0 // pred_check
    _
  $region15: #{block_forward.1} parent=0 // pred_check_branch
    %21 = sbr.rel (0) target = $region17
  $region16: #{block_forward.1} parent=0 // pred_region
    _
  $region17: #{block_forward.1} parent=0 // pred_fallthru
    _
  // Predicated region
  $region18: #{block_forward.1} parent=0 // pred_check
    _
  $region19: #{block_forward.1} parent=0 // pred_check_branch
    %23 = sbr.rel (0) target = $region21
  $region20: #{block_forward.1} parent=0 // pred_region
    _
  $region21: #{block_forward.1} parent=0 // pred_fallthru
    _
  // Predicated region
  $region22: #{block_forward.1} parent=0 // pred_check
    _
  $region23: #{block_forward.1} parent=0 // pred_check_branch
    %25 = sbr.rel (0) target = $region25
  $region24: #{block_forward.1} parent=0 // pred_region
    _
  $region25: #{block_forward.1} parent=0 // pred_fallthru
    _
  // Predicated region
  $region26: #{block_forward.1} parent=0 // pred_check
    _
  $region27: #{block_forward.1} parent=0 // pred_check_branch
    %27 = sbr.rel (0) target = $region29
  $region28: #{block_forward.1} parent=0 // pred_region
    _
  $region29: #{block_forward.1} parent=0 // pred_fallthru
    _
  // Predicated region
  $region30: #{block_forward.1} parent=0 // pred_check
    _
  $region31: #{block_forward.1} parent=0 // pred_check_branch
    %29 = sbr.rel (0) target = $region33
  $region32: #{block_forward.1} parent=0 // pred_region
    _
  $region33: #{block_forward.1} parent=0 // pred_fallthru
    _
  // Predicated region
  $region34: #{block_forward.1} parent=0 // pred_check
    _
  $region35: #{block_forward.1} parent=0 // pred_check_branch
    %31 = sbr.rel (0) target = $region37
  $region36: #{block_forward.1} parent=0 // pred_region
    _
  $region37: #{block_forward.1} parent=0 // pred_fallthru
    _
  %v33 = vld [vmem:[%s8] sm:$0xff]
  %v34 = vld [vmem:[%s0] sm:$0xff]
  %v35 = vld [vmem:[%s0 + $0x8] sm:$0xff]
  %v36 = vld [vmem:[%s0 + $0x10] sm:$0xff]
  %v37 = vld [vmem:[%s0 + $0x18] sm:$0xff]
  %v38 = vld [vmem:[%s2] sm:$0xf]
  %v39 = vld [vmem:[%s2 + $0x4] sm:$0xf]
  %v40 = vld [vmem:[%s2 + $0x8] sm:$0xf]
  %v41 = vld [vmem:[%s2 + $0xc] sm:$0xf]
  %v42 = vld [vmem:[%s2 + $0x10] sm:$0xf]
  %v43 = vld [vmem:[%s2 + $0x14] sm:$0xf]
  %v44 = vld [vmem:[%s2 + $0x18] sm:$0xf]
  %v45 = vld [vmem:[%s2 + $0x1c] sm:$0xf]
  %v46 = vld [vmem:[%s2 + $0x20] sm:$0xf]
  %v47 = vld [vmem:[%s2 + $0x24] sm:$0xf]
  %v48 = vld [vmem:[%s2 + $0x28] sm:$0xf]
  %v49 = vld [vmem:[%s2 + $0x2c] sm:$0xf]
  %v50 = vld [vmem:[%s2 + $0x30] sm:$0xf]
  %v51 = vld [vmem:[%s2 + $0x34] sm:$0xf]
  %v52 = vld [vmem:[%s2 + $0x38] sm:$0xf]
  %v53 = vld [vmem:[%s2 + $0x3c] sm:$0xf]
  %v54 = vld [vmem:[%s2 + $0x40] sm:$0xf]
  %v55 = vld [vmem:[%s2 + $0x44] sm:$0xf]
  %v56 = vld [vmem:[%s2 + $0x48] sm:$0xf]
  %v57 = vld [vmem:[%s2 + $0x4c] sm:$0xf]
  %v58 = vld [vmem:[%s2 + $0x50] sm:$0xf]
  %v59 = vld [vmem:[%s2 + $0x54] sm:$0xf]
  %v60 = vld [vmem:[%s2 + $0x58] sm:$0xf]
  %v61 = vld [vmem:[%s2 + $0x5c] sm:$0xf]
  %v62 = vperm.slane %v33, 0
  %v67 = vunpack.c.l.b16 %v34
  %v68 = vunpack.c.h.b16 %v34
  %v69 = vunpack.c.l.b16 %v35
  %v70 = vunpack.c.h.b16 %v35
  %v71 = vunpack.c.l.b16 %v36
  %v72 = vunpack.c.h.b16 %v36
  %v73 = vunpack.c.l.b16 %v37
  %v74 = vunpack.c.h.b16 %v37
  %v75 = vpack.c.b16 %v69, %v67
  %v76 = vpack.c.b16 %v70, %v68
  %v77 = vpack.c.b16 %v73, %v71
  %v78 = vpack.c.b16 %v74, %v72
  %v105 = vunpack.c.l.b16 %v38
  %v106 = vunpack.c.l.b16 %v39
  %v107 = vunpack.c.l.b16 %v40
  %v108 = vunpack.c.l.b16 %v41
  %v109 = vunpack.c.l.b16 %v42
  %v110 = vunpack.c.l.b16 %v43
  %v111 = vunpack.c.l.b16 %v44
  %v112 = vunpack.c.l.b16 %v45
  %v113 = vunpack.c.l.b16 %v46
  %v114 = vunpack.c.l.b16 %v47
  %v115 = vunpack.c.l.b16 %v48
  %v116 = vunpack.c.l.b16 %v49
  %v117 = vunpack.c.l.b16 %v50
  %v118 = vunpack.c.l.b16 %v51
  %v119 = vunpack.c.l.b16 %v52
  %v120 = vunpack.c.l.b16 %v53
  %v121 = vunpack.c.l.b16 %v54
  %v122 = vunpack.c.l.b16 %v55
  %v123 = vunpack.c.l.b16 %v56
  %v124 = vunpack.c.l.b16 %v57
  %v125 = vunpack.c.l.b16 %v58
  %v126 = vunpack.c.l.b16 %v59
  %v127 = vunpack.c.l.b16 %v60
  %v128 = vunpack.c.l.b16 %v61
  %v129 = vpack.c.b16 %v106, %v105
  %v130 = vpack.c.b16 %v108, %v107
  %v131 = vpack.c.b16 %v110, %v109
  %v132 = vpack.c.b16 %v112, %v111
  %v133 = vpack.c.b16 %v114, %v113
  %v134 = vpack.c.b16 %v116, %v115
  %v135 = vpack.c.b16 %v118, %v117
  %v136 = vpack.c.b16 %v120, %v119
  %v137 = vpack.c.b16 %v122, %v121
  %v138 = vpack.c.b16 %v124, %v123
  %v139 = vpack.c.b16 %v126, %v125
  %v140 = vpack.c.b16 %v128, %v127
  %vm153 = vcmask 523264
  %v155 = vsel %vm153, %v76, 0
  %v158 = vsel %vm153, %v78, 0
  %160 = vmatpush.bf16.msra.mxu0 %v136
  %161 = vmatpush.bf16.msra.mxu0 %v135
  %162 = vmatpush.bf16.msra.mxu0 %v134
  %163 = vmatpush.bf16.msra.mxu0 %v133
  %164 = vmatpush.bf16.msra.mxu0 %v132
  %165 = vmatpush.bf16.msra.mxu0 %v131
  %166 = vmatpush.bf16.msra.mxu0 %v130
  %167 = vmatpush.bf16.msra.mxu0 %v129
  %168 = vmatmul.bf16.gmra.mxu0 %v75
  %v169 = vpop.f32.mrf.mxu0
  %v170 = vadd.f32 %v62, %v169
  %v171 = vpop.f32.mrf.mxu0
  %v172 = vadd.f32 %v62, %v171
  %173 = vmatmul.bf16.gmra.mxu0 %v77
  %v174 = vpop.f32.mrf.mxu0
  %v175 = vadd.f32 %v62, %v174
  %v176 = vpop.f32.mrf.mxu0
  %v177 = vadd.f32 %v62, %v176
  %178 = vdwg.mxu0
  %179 = vmatpush.bf16.msra.mxu0 0
  %180 = vmatpush.bf16.msra.mxu0 0
  %181 = vmatpush.bf16.msra.mxu0 0
  %182 = vmatpush.bf16.msra.mxu0 0
  %183 = vmatpush.bf16.msra.mxu0 %v140
  %184 = vmatpush.bf16.msra.mxu0 %v139
  %185 = vmatpush.bf16.msra.mxu0 %v138
  %186 = vmatpush.bf16.msra.mxu0 %v137
  %187 = vmatmul.bf16.gmra.mxu0 %v155
  %v188 = vpop.f32.mrf.mxu0
  %v189 = vadd.f32 %v170, %v188
  %v190 = vpop.f32.mrf.mxu0
  %v191 = vadd.f32 %v172, %v190
  %192 = vmatmul.bf16.gmra.mxu0 %v158
  %v193 = vpop.f32.mrf.mxu0
  %v194 = vadd.f32 %v175, %v193
  %v195 = vpop.f32.mrf.mxu0
  %v196 = vadd.f32 %v177, %v195
  %197 = vdwg.mxu0
  %v198 = vmax.f32 %v189, 0.0
  %v199 = vmax.f32 %v191, 0.0
  %v200 = vmax.f32 %v194, 0.0
  %v201 = vmax.f32 %v196, 0.0
  %v202 = vadd.f32 %v198, %v199
  %v203 = vadd.f32 %v202, %v200
  %v204 = vadd.f32 %v203, %v201
  %v205 = vrot.slane %v204, 4
  %v206 = vadd.f32 %v204, %v205
  %v207 = vrot.slane %v206, 2
  %v208 = vadd.f32 %v206, %v207
  %v209 = vrot.slane %v208, 1
  %v210 = vadd.f32 %v208, %v209
  %v211 = vrcp.pop 32.0
  %v212 = vmul.f32 32.0, %v211
  %v213 = vsub.f32 1.0, %v212
  %v214 = vmul.f32 %v211, %v213
  %v215 = vadd.f32 %v211, %v214
  %vm216 = vweird.f32 %v211
  %v217 = vsel %vm216, %v211, %v215
  %v218 = vmul.f32 %v210, %v217
  %v219 = vmul.f32 %v198, %v198
  %v220 = vmul.f32 %v199, %v199
  %v221 = vmul.f32 %v200, %v200
  %v222 = vmul.f32 %v201, %v201
  %v223 = vadd.f32 %v219, %v220
  %v224 = vadd.f32 %v223, %v221
  %v225 = vadd.f32 %v224, %v222
  %v226 = vrot.slane %v225, 4
  %v227 = vadd.f32 %v225, %v226
  %v228 = vrot.slane %v227, 2
  %v229 = vadd.f32 %v227, %v228
  %v230 = vrot.slane %v229, 1
  %v231 = vadd.f32 %v229, %v230
  %v232 = vmul.f32 %v231, %v217
  %233 = vrot.lane.b32.xlu0 %v218, 8
  %v234 = vpop.permute.xlu0 %233
  %v235 = vadd.f32 %v218, %v234
  %236 = vrot.lane.b32.xlu0 %v232, 8
  %v237 = vpop.permute.xlu0 %236
  %v238 = vadd.f32 %v232, %v237
  %239 = vrot.lane.b32.xlu0 %v235, 16
  %v240 = vpop.permute.xlu0 %239
  %v241 = vadd.f32 %v235, %v240
  %242 = vrot.lane.b32.xlu0 %v238, 16
  %v243 = vpop.permute.xlu0 %242
  %v244 = vadd.f32 %v238, %v243
  %245 = vrot.lane.b32.xlu0 %v241, 32
  %v246 = vpop.permute.xlu0 %245
  %v247 = vadd.f32 %v241, %v246
  %248 = vrot.lane.b32.xlu0 %v244, 32
  %v249 = vpop.permute.xlu0 %248
  %v250 = vadd.f32 %v244, %v249
  %251 = vrot.lane.b32.xlu0 %v247, 64
  %v252 = vpop.permute.xlu0 %251
  %v253 = vadd.f32 %v247, %v252
  %254 = vrot.lane.b32.xlu0 %v250, 64
  %v255 = vpop.permute.xlu0 %254
  %v256 = vadd.f32 %v250, %v255
  %v257 = vmul.f32 %v253, 0.0625
  %v258 = vmul.f32 %v256, 0.0625
  %v259 = vmul.f32 %v257, %v257
  %v260 = vsub.f32 %v258, %v259
  %v261 = vadd.f32 %v260, 1e-05
  %v262 = vrsqrt.pop %v261
  %v263 = vmul.f32 %v262, %v261
  %v264 = vmul.f32 %v263, %v262
  %v265 = vmul.f32 0.5, %v264
  %v266 = vsub.f32 1.5, %v265
  %v267 = vmul.f32 %v262, %v266
  %vm268 = vweird.f32 %v261
  %vm269 = vweird.f32 %v262
  %vm270 = vmor %vm268, %vm269
  %v271 = vsel %vm270, %v262, %v267
  %v273 = vrot.slane %v271, 5
  %v275 = vmul.f32 %v33, %v273
  %v276 = vperm.slane %v275, 3
  %v277 = vmul.f32 %v198, %v276
  %v278 = vmul.f32 %v199, %v276
  %v279 = vmul.f32 %v200, %v276
  %v280 = vmul.f32 %v201, %v276
  %v282 = vrot.slane %v275, 3
  %v284 = vmul.f32 %v257, %v282
  %v286 = vrot.slane %v284, 4
  %v288 = vsub.f32 %v33, %v286
  %v289 = vperm.slane %v288, 4
  %v290 = vadd.f32 %v277, %v289
  %v291 = vadd.f32 %v278, %v289
  %v292 = vadd.f32 %v279, %v289
  %v293 = vadd.f32 %v280, %v289
  %v294 = vld [vmem:[%s1] sm:$0x3]
  %v295 = vld [vmem:[%s7] sm:$0xff]
  %v296 = vld [vmem:[%s7 + $0x8] sm:$0xff]
  %v297 = vld [vmem:[%s7 + $0x10] sm:$0xff]
  %v298 = vld [vmem:[%s7 + $0x18] sm:$0xff]
  %v299 = vperm.slane %v33, 2
  %vm300 = vcmask 261120
  %v302 = vsel %vm300, %v294, 0
  %304 = vmatpush.msra.mxu0 0.0
  %305 = vmatpush.msra.mxu0 0.0
  %306 = vmatpush.msra.mxu0 0.0
  %307 = vmatpush.msra.mxu0 0.0
  %308 = vmatpush.msra.mxu0 0.0
  %309 = vmatpush.msra.mxu0 0.0
  %310 = vmatpush.msra.mxu0 0.0
  %311 = vmatpush.msra.mxu0 0.0
  %312 = vmatpush.msra.mxu0 0.0
  %313 = vmatpush.msra.mxu0 0.0
  %314 = vmatpush.msra.mxu0 0.0
  %315 = vmatpush.msra.mxu0 0.0
  %316 = vmatpush.msra.mxu0 %v298
  %317 = vmatpush.msra.mxu0 %v297
  %318 = vmatpush.msra.mxu0 %v296
  %319 = vmatpush.msra.mxu0 %v295
  %320 = vmatmul.f32.gmra.mxu0 %v302
  %v321 = vpop.f32.mrf.mxu0
  %v322 = vadd.f32 %v299, %v321
  %323 = vdwg.mxu0
  %v324 = vmax.f32 %v322, 0.0
  %v325 = vlaneseq
  %v326 = vshrl.u32 %v325, 7
  %v327 = vadd.s32 %v326, 8
  %v328 = vadd.s32 %v326, 16
  %v329 = vadd.s32 %v326, 24
  %vm330 = vcmp.ge.s32.totalorder %v326, 0
  %vm331 = vcmp.ge.s32.totalorder %v327, 0
  %vm332 = vcmp.ge.s32.totalorder %v328, 0
  %vm333 = vcmp.ge.s32.totalorder %v329, 0
  %vm334 = vcmp.lt.s32.totalorder %v326, 16
  %vm335 = vcmp.lt.s32.totalorder %v327, 16
  %vm336 = vcmp.lt.s32.totalorder %v328, 16
  %vm337 = vcmp.lt.s32.totalorder %v329, 16
  %vm338 = vmand %vm330, %vm334
  %vm339 = vmand %vm331, %vm335
  %vm340 = vmand %vm332, %vm336
  %vm341 = vmand %vm333, %vm337
  %v342 = vperm.slane %v324, 0
  %v343 = vsel %vm338, %v342, 0.0
  %v344 = vsel %vm339, %v342, 0.0
  %v345 = vsel %vm340, %v342, 0.0
  %v346 = vsel %vm341, %v342, 0.0
  %v347 = vadd.f32 %v290, %v343
  %v348 = vadd.f32 %v291, %v344
  %v349 = vadd.f32 %v292, %v345
  %v350 = vadd.f32 %v293, %v346
  %vm351 = vcmp.ge.s32.totalorder %v326, 16
  %vm352 = vcmp.ge.s32.totalorder %v327, 16
  %vm353 = vcmp.ge.s32.totalorder %v328, 16
  %vm354 = vcmp.ge.s32.totalorder %v329, 16
  %vm355 = vcmp.lt.s32.totalorder %v326, 32
  %vm356 = vcmp.lt.s32.totalorder %v327, 32
  %vm357 = vcmp.lt.s32.totalorder %v328, 32
  %vm358 = vcmp.lt.s32.totalorder %v329, 32
  %vm359 = vmand %vm351, %vm355
  %vm360 = vmand %vm352, %vm356
  %vm361 = vmand %vm353, %vm357
  %vm362 = vmand %vm354, %vm358
  %v363 = vperm.slane %v324, 1
  %v364 = vsel %vm359, %v363, 0.0
  %v365 = vsel %vm360, %v363, 0.0
  %v366 = vsel %vm361, %v363, 0.0
  %v367 = vsel %vm362, %v363, 0.0
  %v368 = vadd.f32 %v347, %v364
  %v369 = vadd.f32 %v348, %v365
  %v370 = vadd.f32 %v349, %v366
  %v371 = vadd.f32 %v350, %v367
  %v372 = vpack.c.bf16 %v368, %v368
  %v373 = vpack.c.bf16 %v369, %v369
  %v374 = vpack.c.bf16 %v370, %v370
  %v375 = vpack.c.bf16 %v371, %v371
  %v376 = vld [vmem:[%s5] sm:$0xf]
  %v377 = vld [vmem:[%s5 + $0x4] sm:$0xf]
  %v378 = vld [vmem:[%s5 + $0x8] sm:$0xf]
  %v379 = vld [vmem:[%s5 + $0xc] sm:$0xf]
  %v384 = vunpack.c.l.b16 %v376
  %v385 = vunpack.c.l.b16 %v377
  %v386 = vunpack.c.l.b16 %v378
  %v387 = vunpack.c.l.b16 %v379
  %v388 = vpack.c.b16 %v385, %v384
  %v389 = vpack.c.b16 %v387, %v386
  %v394 = vunpack.c.l.b16 %v372
  %v395 = vunpack.c.l.b16 %v373
  %v396 = vunpack.c.l.b16 %v374
  %v397 = vunpack.c.l.b16 %v375
  %v398 = vpack.c.b16 %v395, %v394
  %v399 = vpack.c.b16 %v397, %v396
  %v403 = vsel %vm300, %v388, 0
  %v406 = vsel %vm300, %v389, 0
  %408 = vmatpush.bf16.msra.mxu0 0
  %409 = vmatpush.bf16.msra.mxu0 0
  %410 = vmatpush.bf16.msra.mxu0 0
  %411 = vmatpush.bf16.msra.mxu0 0
  %412 = vmatpush.bf16.msra.mxu0 0
  %413 = vmatpush.bf16.msra.mxu0 0
  %414 = vmatpush.bf16.msra.mxu0 %v399
  %415 = vmatpush.bf16.msra.mxu0 %v398
  %416 = vmatmul.bf16.gmra.mxu0 %v403
  %v417 = vpop.f32.mrf.mxu0
  %v418 = vadd.f32 0.0, %v417
  %v419 = vpop.f32.mrf.mxu0
  %v420 = vadd.f32 0.0, %v419
  %421 = vmatmul.bf16.gmra.mxu0 %v406
  %v422 = vpop.f32.mrf.mxu0
  %v423 = vadd.f32 0.0, %v422
  %v424 = vpop.f32.mrf.mxu0
  %v425 = vadd.f32 0.0, %v424
  %426 = vdwg.mxu0
  %v427 = vpack.c.bf16 %v418, %v418
  %v428 = vpack.c.bf16 %v420, %v420
  %v429 = vpack.c.bf16 %v423, %v423
  %v430 = vpack.c.bf16 %v425, %v425
  %s431 = scalar_lea.vmem %s5, 16
  %v432 = vld [vmem:[%s431] sm:$0xf]
  %v433 = vld [vmem:[%s431 + $0x4] sm:$0xf]
  %v434 = vld [vmem:[%s431 + $0x8] sm:$0xf]
  %v435 = vld [vmem:[%s431 + $0xc] sm:$0xf]
  %v440 = vunpack.c.l.b16 %v432
  %v441 = vunpack.c.l.b16 %v433
  %v442 = vunpack.c.l.b16 %v434
  %v443 = vunpack.c.l.b16 %v435
  %v444 = vpack.c.b16 %v441, %v440
  %v445 = vpack.c.b16 %v443, %v442
  %v447 = vsel %vm300, %v444, 0
  %v450 = vsel %vm300, %v445, 0
  %452 = vmatpush.bf16.msra.mxu0 0
  %453 = vmatpush.bf16.msra.mxu0 0
  %454 = vmatpush.bf16.msra.mxu0 0
  %455 = vmatpush.bf16.msra.mxu0 0
  %456 = vmatpush.bf16.msra.mxu0 0
  %457 = vmatpush.bf16.msra.mxu0 0
  %458 = vmatpush.bf16.msra.mxu0 %v399
  %459 = vmatpush.bf16.msra.mxu0 %v398
  %460 = vmatmul.bf16.gmra.mxu0 %v447
  %v461 = vpop.f32.mrf.mxu0
  %v462 = vadd.f32 0.0, %v461
  %v463 = vpop.f32.mrf.mxu0
  %v464 = vadd.f32 0.0, %v463
  %465 = vmatmul.bf16.gmra.mxu0 %v450
  %v466 = vpop.f32.mrf.mxu0
  %v467 = vadd.f32 0.0, %v466
  %v468 = vpop.f32.mrf.mxu0
  %v469 = vadd.f32 0.0, %v468
  %470 = vdwg.mxu0
  %v471 = vpack.c.bf16 %v462, %v462
  %v472 = vpack.c.bf16 %v464, %v464
  %v473 = vpack.c.bf16 %v467, %v467
  %v474 = vpack.c.bf16 %v469, %v469
  %v479 = vunpack.c.l.b16 %v427
  %v480 = vunpack.c.l.b16 %v428
  %v481 = vunpack.c.l.b16 %v429
  %v482 = vunpack.c.l.b16 %v430
  %v483 = vpack.c.b16 %v480, %v479
  %v484 = vpack.c.b16 %v482, %v481
  %v491 = vunpack.c.l.b16 %v471
  %v492 = vunpack.c.l.b16 %v472
  %v493 = vunpack.c.l.b16 %v473
  %v494 = vunpack.c.l.b16 %v474
  %v495 = vpack.c.b16 %v492, %v491
  %v496 = vpack.c.b16 %v494, %v493
  %v499 = vld [vmem:[%s3] sm:$0xf]
  %v500 = vld [vmem:[%s3 + $0x4] sm:$0xf]
  %v501 = vld [vmem:[%s3 + $0x8] sm:$0xf]
  %v502 = vld [vmem:[%s3 + $0xc] sm:$0xf]
  %v503 = vld [vmem:[%s3 + $0x10] sm:$0xf]
  %v504 = vld [vmem:[%s3 + $0x14] sm:$0xf]
  %v505 = vld [vmem:[%s3 + $0x18] sm:$0xf]
  %v506 = vld [vmem:[%s3 + $0x1c] sm:$0xf]
  %v507 = vld [vmem:[%s3 + $0x20] sm:$0xf]
  %v508 = vld [vmem:[%s3 + $0x24] sm:$0xf]
  %v509 = vld [vmem:[%s3 + $0x28] sm:$0xf]
  %v510 = vld [vmem:[%s3 + $0x2c] sm:$0xf]
  %v511 = vld [vmem:[%s3 + $0x30] sm:$0xf]
  %v512 = vld [vmem:[%s3 + $0x34] sm:$0xf]
  %v513 = vld [vmem:[%s3 + $0x38] sm:$0xf]
  %v514 = vld [vmem:[%s3 + $0x3c] sm:$0xf]
  %v515 = vld [vmem:[%s3 + $0x40] sm:$0xf]
  %v516 = vld [vmem:[%s3 + $0x44] sm:$0xf]
  %v517 = vld [vmem:[%s3 + $0x48] sm:$0xf]
  %v518 = vld [vmem:[%s3 + $0x4c] sm:$0xf]
  %v519 = vld [vmem:[%s3 + $0x50] sm:$0xf]
  %v520 = vld [vmem:[%s3 + $0x54] sm:$0xf]
  %v521 = vld [vmem:[%s3 + $0x58] sm:$0xf]
  %v522 = vld [vmem:[%s3 + $0x5c] sm:$0xf]
  %v523 = vld [vmem:[%s3 + $0x60] sm:$0xf]
  %v524 = vld [vmem:[%s3 + $0x64] sm:$0xf]
  %v525 = vld [vmem:[%s3 + $0x68] sm:$0xf]
  %v526 = vld [vmem:[%s3 + $0x6c] sm:$0xf]
  %v527 = vld [vmem:[%s3 + $0x70] sm:$0xf]
  %v528 = vld [vmem:[%s3 + $0x74] sm:$0xf]
  %v529 = vld [vmem:[%s3 + $0x78] sm:$0xf]
  %v530 = vld [vmem:[%s3 + $0x7c] sm:$0xf]
  %v531 = vld [vmem:[%s3 + $0x80] sm:$0xf]
  %v532 = vld [vmem:[%s3 + $0x84] sm:$0xf]
  %v533 = vld [vmem:[%s3 + $0x88] sm:$0xf]
  %v534 = vld [vmem:[%s3 + $0x8c] sm:$0xf]
  %v535 = vld [vmem:[%s3 + $0x90] sm:$0xf]
  %v536 = vld [vmem:[%s3 + $0x94] sm:$0xf]
  %v537 = vld [vmem:[%s3 + $0x98] sm:$0xf]
  %v538 = vld [vmem:[%s3 + $0x9c] sm:$0xf]
  %v539 = vld [vmem:[%s3 + $0xa0] sm:$0xf]
  %v540 = vld [vmem:[%s3 + $0xa4] sm:$0xf]
  %v541 = vld [vmem:[%s3 + $0xa8] sm:$0xf]
  %v542 = vld [vmem:[%s3 + $0xac] sm:$0xf]
  %v543 = vld [vmem:[%s3 + $0xb0] sm:$0xf]
  %v544 = vld [vmem:[%s3 + $0xb4] sm:$0xf]
  %v545 = vld [vmem:[%s3 + $0xb8] sm:$0xf]
  %v546 = vld [vmem:[%s3 + $0xbc] sm:$0xf]
  %v547 = vperm.slane %v33, 1
  %v596 = vunpack.c.l.b16 %v499
  %v597 = vunpack.c.l.b16 %v500
  %v598 = vunpack.c.l.b16 %v501
  %v599 = vunpack.c.l.b16 %v502
  %v600 = vunpack.c.l.b16 %v503
  %v601 = vunpack.c.l.b16 %v504
  %v602 = vunpack.c.l.b16 %v505
  %v603 = vunpack.c.l.b16 %v506
  %v604 = vunpack.c.l.b16 %v507
  %v605 = vunpack.c.l.b16 %v508
  %v606 = vunpack.c.l.b16 %v509
  %v607 = vunpack.c.l.b16 %v510
  %v608 = vunpack.c.l.b16 %v511
  %v609 = vunpack.c.l.b16 %v512
  %v610 = vunpack.c.l.b16 %v513
  %v611 = vunpack.c.l.b16 %v514
  %v612 = vunpack.c.l.b16 %v515
  %v613 = vunpack.c.l.b16 %v516
  %v614 = vunpack.c.l.b16 %v517
  %v615 = vunpack.c.l.b16 %v518
  %v616 = vunpack.c.l.b16 %v519
  %v617 = vunpack.c.l.b16 %v520
  %v618 = vunpack.c.l.b16 %v521
  %v619 = vunpack.c.l.b16 %v522
  %v620 = vunpack.c.l.b16 %v523
  %v621 = vunpack.c.l.b16 %v524
  %v622 = vunpack.c.l.b16 %v525
  %v623 = vunpack.c.l.b16 %v526
  %v624 = vunpack.c.l.b16 %v527
  %v625 = vunpack.c.l.b16 %v528
  %v626 = vunpack.c.l.b16 %v529
  %v627 = vunpack.c.l.b16 %v530
  %v628 = vunpack.c.l.b16 %v531
  %v629 = vunpack.c.l.b16 %v532
  %v630 = vunpack.c.l.b16 %v533
  %v631 = vunpack.c.l.b16 %v534
  %v632 = vunpack.c.l.b16 %v535
  %v633 = vunpack.c.l.b16 %v536
  %v634 = vunpack.c.l.b16 %v537
  %v635 = vunpack.c.l.b16 %v538
  %v636 = vunpack.c.l.b16 %v539
  %v637 = vunpack.c.l.b16 %v540
  %v638 = vunpack.c.l.b16 %v541
  %v639 = vunpack.c.l.b16 %v542
  %v640 = vunpack.c.l.b16 %v543
  %v641 = vunpack.c.l.b16 %v544
  %v642 = vunpack.c.l.b16 %v545
  %v643 = vunpack.c.l.b16 %v546
  %v644 = vpack.c.b16 %v597, %v596
  %v645 = vpack.c.b16 %v599, %v598
  %v646 = vpack.c.b16 %v601, %v600
  %v647 = vpack.c.b16 %v603, %v602
  %v648 = vpack.c.b16 %v605, %v604
  %v649 = vpack.c.b16 %v607, %v606
  %v650 = vpack.c.b16 %v609, %v608
  %v651 = vpack.c.b16 %v611, %v610
  %v652 = vpack.c.b16 %v613, %v612
  %v653 = vpack.c.b16 %v615, %v614
  %v654 = vpack.c.b16 %v617, %v616
  %v655 = vpack.c.b16 %v619, %v618
  %v656 = vpack.c.b16 %v621, %v620
  %v657 = vpack.c.b16 %v623, %v622
  %v658 = vpack.c.b16 %v625, %v624
  %v659 = vpack.c.b16 %v627, %v626
  %v660 = vpack.c.b16 %v629, %v628
  %v661 = vpack.c.b16 %v631, %v630
  %v662 = vpack.c.b16 %v633, %v632
  %v663 = vpack.c.b16 %v635, %v634
  %v664 = vpack.c.b16 %v637, %v636
  %v665 = vpack.c.b16 %v639, %v638
  %v666 = vpack.c.b16 %v641, %v640
  %v667 = vpack.c.b16 %v643, %v642
  %692 = vmatpush.bf16.msra.mxu0 %v651
  %693 = vmatpush.bf16.msra.mxu0 %v650
  %694 = vmatpush.bf16.msra.mxu0 %v649
  %695 = vmatpush.bf16.msra.mxu0 %v648
  %696 = vmatpush.bf16.msra.mxu0 %v647
  %697 = vmatpush.bf16.msra.mxu0 %v646
  %698 = vmatpush.bf16.msra.mxu0 %v645
  %699 = vmatpush.bf16.msra.mxu0 %v644
  %700 = vmatmul.bf16.gmra.mxu0 %v483
  %v701 = vpop.f32.mrf.mxu0
  %v702 = vadd.f32 %v547, %v701
  %v703 = vpop.f32.mrf.mxu0
  %v704 = vadd.f32 %v547, %v703
  %705 = vmatmul.bf16.gmra.mxu0 %v484
  %v706 = vpop.f32.mrf.mxu0
  %v707 = vadd.f32 %v547, %v706
  %v708 = vpop.f32.mrf.mxu0
  %v709 = vadd.f32 %v547, %v708
  %710 = vdwg.mxu0
  %711 = vmatpush.bf16.msra.mxu0 %v659
  %712 = vmatpush.bf16.msra.mxu0 %v658
  %713 = vmatpush.bf16.msra.mxu0 %v657
  %714 = vmatpush.bf16.msra.mxu0 %v656
  %715 = vmatpush.bf16.msra.mxu0 %v655
  %716 = vmatpush.bf16.msra.mxu0 %v654
  %717 = vmatpush.bf16.msra.mxu0 %v653
  %718 = vmatpush.bf16.msra.mxu0 %v652
  %719 = vmatmul.bf16.gmra.mxu0 %v398
  %v720 = vpop.f32.mrf.mxu0
  %v721 = vadd.f32 %v702, %v720
  %v722 = vpop.f32.mrf.mxu0
  %v723 = vadd.f32 %v704, %v722
  %724 = vmatmul.bf16.gmra.mxu0 %v399
  %v725 = vpop.f32.mrf.mxu0
  %v726 = vadd.f32 %v707, %v725
  %v727 = vpop.f32.mrf.mxu0
  %v728 = vadd.f32 %v709, %v727
  %729 = vdwg.mxu0
  %730 = vmatpush.bf16.msra.mxu0 %v667
  %731 = vmatpush.bf16.msra.mxu0 %v666
  %732 = vmatpush.bf16.msra.mxu0 %v665
  %733 = vmatpush.bf16.msra.mxu0 %v664
  %734 = vmatpush.bf16.msra.mxu0 %v663
  %735 = vmatpush.bf16.msra.mxu0 %v662
  %736 = vmatpush.bf16.msra.mxu0 %v661
  %737 = vmatpush.bf16.msra.mxu0 %v660
  %738 = vmatmul.bf16.gmra.mxu0 %v495
  %v739 = vpop.f32.mrf.mxu0
  %v740 = vadd.f32 %v721, %v739
  %v741 = vpop.f32.mrf.mxu0
  %v742 = vadd.f32 %v723, %v741
  %743 = vmatmul.bf16.gmra.mxu0 %v496
  %v744 = vpop.f32.mrf.mxu0
  %v745 = vadd.f32 %v726, %v744
  %v746 = vpop.f32.mrf.mxu0
  %v747 = vadd.f32 %v728, %v746
  %748 = vdwg.mxu0
  %v749 = vmax.f32 %v740, 0.0
  %v750 = vmax.f32 %v742, 0.0
  %v751 = vmax.f32 %v745, 0.0
  %v752 = vmax.f32 %v747, 0.0
  %v753 = vadd.f32 %v749, %v750
  %v754 = vadd.f32 %v753, %v751
  %v755 = vadd.f32 %v754, %v752
  %v756 = vrot.slane %v755, 4
  %v757 = vadd.f32 %v755, %v756
  %v758 = vrot.slane %v757, 2
  %v759 = vadd.f32 %v757, %v758
  %v760 = vrot.slane %v759, 1
  %v761 = vadd.f32 %v759, %v760
  %v762 = vmul.f32 %v761, %v217
  %v763 = vmul.f32 %v749, %v749
  %v764 = vmul.f32 %v750, %v750
  %v765 = vmul.f32 %v751, %v751
  %v766 = vmul.f32 %v752, %v752
  %v767 = vadd.f32 %v763, %v764
  %v768 = vadd.f32 %v767, %v765
  %v769 = vadd.f32 %v768, %v766
  %v770 = vrot.slane %v769, 4
  %v771 = vadd.f32 %v769, %v770
  %v772 = vrot.slane %v771, 2
  %v773 = vadd.f32 %v771, %v772
  %v774 = vrot.slane %v773, 1
  %v775 = vadd.f32 %v773, %v774
  %v776 = vmul.f32 %v775, %v217
  %777 = vrot.lane.b32.xlu0 %v762, 8
  %v778 = vpop.permute.xlu0 %777
  %v779 = vadd.f32 %v762, %v778
  %780 = vrot.lane.b32.xlu0 %v776, 8
  %v781 = vpop.permute.xlu0 %780
  %v782 = vadd.f32 %v776, %v781
  %783 = vrot.lane.b32.xlu0 %v779, 16
  %v784 = vpop.permute.xlu0 %783
  %v785 = vadd.f32 %v779, %v784
  %786 = vrot.lane.b32.xlu0 %v782, 16
  %v787 = vpop.permute.xlu0 %786
  %v788 = vadd.f32 %v782, %v787
  %789 = vrot.lane.b32.xlu0 %v785, 32
  %v790 = vpop.permute.xlu0 %789
  %v791 = vadd.f32 %v785, %v790
  %792 = vrot.lane.b32.xlu0 %v788, 32
  %v793 = vpop.permute.xlu0 %792
  %v794 = vadd.f32 %v788, %v793
  %795 = vrot.lane.b32.xlu0 %v791, 64
  %v796 = vpop.permute.xlu0 %795
  %v797 = vadd.f32 %v791, %v796
  %798 = vrot.lane.b32.xlu0 %v794, 64
  %v799 = vpop.permute.xlu0 %798
  %v800 = vadd.f32 %v794, %v799
  %v801 = vmul.f32 %v797, 0.0625
  %v802 = vmul.f32 %v800, 0.0625
  %v803 = vmul.f32 %v801, %v801
  %v804 = vsub.f32 %v802, %v803
  %v805 = vadd.f32 %v804, 1e-05
  %v806 = vrsqrt.pop %v805
  %v807 = vmul.f32 %v806, %v805
  %v808 = vmul.f32 %v807, %v806
  %v809 = vmul.f32 0.5, %v808
  %v810 = vsub.f32 1.5, %v809
  %v811 = vmul.f32 %v806, %v810
  %vm812 = vweird.f32 %v805
  %vm813 = vweird.f32 %v806
  %vm814 = vmor %vm812, %vm813
  %v815 = vsel %vm814, %v806, %v811
  %v817 = vrot.slane %v815, 5
  %v819 = vmul.f32 %v33, %v817
  %v820 = vperm.slane %v819, 3
  %v821 = vmul.f32 %v749, %v820
  %v822 = vmul.f32 %v750, %v820
  %v823 = vmul.f32 %v751, %v820
  %v824 = vmul.f32 %v752, %v820
  %v826 = vrot.slane %v819, 3
  %v828 = vmul.f32 %v801, %v826
  %v830 = vrot.slane %v828, 4
  %v832 = vsub.f32 %v33, %v830
  %v833 = vperm.slane %v832, 4
  %v834 = vadd.f32 %v821, %v833
  %v835 = vadd.f32 %v822, %v833
  %v836 = vadd.f32 %v823, %v833
  %v837 = vadd.f32 %v824, %v833
  %v838 = vpack.c.bf16 %v835, %v834
  %v839 = vpack.c.bf16 %v837, %v836
  %v840 = vld [vmem:[%s6] sm:$0xf]
  %v841 = vld [vmem:[%s6 + $0x4] sm:$0xf]
  %v844 = vunpack.c.l.b16 %v840
  %v845 = vunpack.c.l.b16 %v841
  %v846 = vpack.c.b16 %v845, %v844
  %v848 = vsel %vm300, %v846, 0
  %850 = vmatpush.bf16.msra.mxu0 0
  %851 = vmatpush.bf16.msra.mxu0 0
  %852 = vmatpush.bf16.msra.mxu0 0
  %853 = vmatpush.bf16.msra.mxu0 0
  %854 = vmatpush.bf16.msra.mxu0 0
  %855 = vmatpush.bf16.msra.mxu0 0
  %856 = vmatpush.bf16.msra.mxu0 %v839
  %857 = vmatpush.bf16.msra.mxu0 %v838
  %858 = vmatmul.bf16.gmra.mxu0 %v848
  %v859 = vpop.f32.mrf.mxu0
  %v860 = vadd.f32 0.0, %v859
  %v861 = vpop.f32.mrf.mxu0
  %v862 = vadd.f32 0.0, %v861
  %863 = vdwg.mxu0
  %v864 = vpack.c.bf16 %v860, %v860
  %v865 = vpack.c.bf16 %v862, %v862
  %s866 = scalar_lea.vmem %s6, 8
  %v867 = vld [vmem:[%s866] sm:$0xf]
  %v868 = vld [vmem:[%s866 + $0x4] sm:$0xf]
  %v871 = vunpack.c.l.b16 %v867
  %v872 = vunpack.c.l.b16 %v868
  %v873 = vpack.c.b16 %v872, %v871
  %v875 = vsel %vm300, %v873, 0
  %877 = vmatpush.bf16.msra.mxu0 0
  %878 = vmatpush.bf16.msra.mxu0 0
  %879 = vmatpush.bf16.msra.mxu0 0
  %880 = vmatpush.bf16.msra.mxu0 0
  %881 = vmatpush.bf16.msra.mxu0 0
  %882 = vmatpush.bf16.msra.mxu0 0
  %883 = vmatpush.bf16.msra.mxu0 %v839
  %884 = vmatpush.bf16.msra.mxu0 %v838
  %885 = vmatmul.bf16.gmra.mxu0 %v875
  %v886 = vpop.f32.mrf.mxu0
  %v887 = vadd.f32 0.0, %v886
  %v888 = vpop.f32.mrf.mxu0
  %v889 = vadd.f32 0.0, %v888
  %890 = vdwg.mxu0
  %v891 = vpack.c.bf16 %v887, %v887
  %v892 = vpack.c.bf16 %v889, %v889
  %s893 = scalar_lea.vmem %s6, 16
  %v894 = vld [vmem:[%s893] sm:$0xf]
  %v895 = vld [vmem:[%s893 + $0x4] sm:$0xf]
  %v898 = vunpack.c.l.b16 %v894
  %v899 = vunpack.c.l.b16 %v895
  %v900 = vpack.c.b16 %v899, %v898
  %v902 = vsel %vm300, %v900, 0
  %904 = vmatpush.bf16.msra.mxu0 0
  %905 = vmatpush.bf16.msra.mxu0 0
  %906 = vmatpush.bf16.msra.mxu0 0
  %907 = vmatpush.bf16.msra.mxu0 0
  %908 = vmatpush.bf16.msra.mxu0 0
  %909 = vmatpush.bf16.msra.mxu0 0
  %910 = vmatpush.bf16.msra.mxu0 %v839
  %911 = vmatpush.bf16.msra.mxu0 %v838
  %912 = vmatmul.bf16.gmra.mxu0 %v902
  %v913 = vpop.f32.mrf.mxu0
  %v914 = vadd.f32 0.0, %v913
  %v915 = vpop.f32.mrf.mxu0
  %v916 = vadd.f32 0.0, %v915
  %917 = vdwg.mxu0
  %v918 = vpack.c.bf16 %v914, %v914
  %v919 = vpack.c.bf16 %v916, %v916
  %s920 = scalar_lea.vmem %s6, 24
  %v921 = vld [vmem:[%s920] sm:$0xf]
  %v922 = vld [vmem:[%s920 + $0x4] sm:$0xf]
  %v925 = vunpack.c.l.b16 %v921
  %v926 = vunpack.c.l.b16 %v922
  %v927 = vpack.c.b16 %v926, %v925
  %v929 = vsel %vm300, %v927, 0
  %931 = vmatpush.bf16.msra.mxu0 0
  %932 = vmatpush.bf16.msra.mxu0 0
  %933 = vmatpush.bf16.msra.mxu0 0
  %934 = vmatpush.bf16.msra.mxu0 0
  %935 = vmatpush.bf16.msra.mxu0 0
  %936 = vmatpush.bf16.msra.mxu0 0
  %937 = vmatpush.bf16.msra.mxu0 %v839
  %938 = vmatpush.bf16.msra.mxu0 %v838
  %939 = vmatmul.bf16.gmra.mxu0 %v929
  %v940 = vpop.f32.mrf.mxu0
  %v941 = vadd.f32 0.0, %v940
  %v942 = vpop.f32.mrf.mxu0
  %v943 = vadd.f32 0.0, %v942
  %944 = vdwg.mxu0
  %v945 = vpack.c.bf16 %v941, %v941
  %v946 = vpack.c.bf16 %v943, %v943
  %v949 = vunpack.c.l.b16 %v864
  %v950 = vunpack.c.l.b16 %v865
  %v951 = vpack.c.b16 %v950, %v949
  %v955 = vunpack.c.l.b16 %v891
  %v956 = vunpack.c.l.b16 %v892
  %v957 = vpack.c.b16 %v956, %v955
  %v961 = vunpack.c.l.b16 %v918
  %v962 = vunpack.c.l.b16 %v919
  %v963 = vpack.c.b16 %v962, %v961
  %v967 = vunpack.c.l.b16 %v945
  %v968 = vunpack.c.l.b16 %v946
  %v969 = vpack.c.b16 %v968, %v967
  %v971 = vld [vmem:[%s4] sm:$0xf]
  %v972 = vld [vmem:[%s4 + $0x4] sm:$0xf]
  %v973 = vld [vmem:[%s4 + $0x8] sm:$0xf]
  %v974 = vld [vmem:[%s4 + $0xc] sm:$0xf]
  %v975 = vld [vmem:[%s4 + $0x10] sm:$0xf]
  %v976 = vld [vmem:[%s4 + $0x14] sm:$0xf]
  %v977 = vld [vmem:[%s4 + $0x18] sm:$0xf]
  %v978 = vld [vmem:[%s4 + $0x1c] sm:$0xf]
  %v979 = vld [vmem:[%s4 + $0x20] sm:$0xf]
  %v980 = vld [vmem:[%s4 + $0x24] sm:$0xf]
  %v981 = vld [vmem:[%s4 + $0x28] sm:$0xf]
  %v982 = vld [vmem:[%s4 + $0x2c] sm:$0xf]
  %v983 = vld [vmem:[%s4 + $0x30] sm:$0xf]
  %v984 = vld [vmem:[%s4 + $0x34] sm:$0xf]
  %v985 = vld [vmem:[%s4 + $0x38] sm:$0xf]
  %v986 = vld [vmem:[%s4 + $0x3c] sm:$0xf]
  %v987 = vld [vmem:[%s4 + $0x40] sm:$0xf]
  %v988 = vld [vmem:[%s4 + $0x44] sm:$0xf]
  %v989 = vld [vmem:[%s4 + $0x48] sm:$0xf]
  %v990 = vld [vmem:[%s4 + $0x4c] sm:$0xf]
  %v991 = vld [vmem:[%s4 + $0x50] sm:$0xf]
  %v992 = vld [vmem:[%s4 + $0x54] sm:$0xf]
  %v993 = vld [vmem:[%s4 + $0x58] sm:$0xf]
  %v994 = vld [vmem:[%s4 + $0x5c] sm:$0xf]
  %v995 = vld [vmem:[%s4 + $0x60] sm:$0xf]
  %v996 = vld [vmem:[%s4 + $0x64] sm:$0xf]
  %v997 = vld [vmem:[%s4 + $0x68] sm:$0xf]
  %v998 = vld [vmem:[%s4 + $0x6c] sm:$0xf]
  %v999 = vld [vmem:[%s4 + $0x70] sm:$0xf]
  %v1000 = vld [vmem:[%s4 + $0x74] sm:$0xf]
  %v1001 = vld [vmem:[%s4 + $0x78] sm:$0xf]
  %v1002 = vld [vmem:[%s4 + $0x7c] sm:$0xf]
  %v1003 = vld [vmem:[%s4 + $0x80] sm:$0xf]
  %v1004 = vld [vmem:[%s4 + $0x84] sm:$0xf]
  %v1005 = vld [vmem:[%s4 + $0x88] sm:$0xf]
  %v1006 = vld [vmem:[%s4 + $0x8c] sm:$0xf]
  %v1007 = vld [vmem:[%s4 + $0x90] sm:$0xf]
  %v1008 = vld [vmem:[%s4 + $0x94] sm:$0xf]
  %v1009 = vld [vmem:[%s4 + $0x98] sm:$0xf]
  %v1010 = vld [vmem:[%s4 + $0x9c] sm:$0xf]
  %v1011 = vld [vmem:[%s4 + $0xa0] sm:$0xf]
  %v1012 = vld [vmem:[%s4 + $0xa4] sm:$0xf]
  %v1013 = vld [vmem:[%s4 + $0xa8] sm:$0xf]
  %v1014 = vld [vmem:[%s4 + $0xac] sm:$0xf]
  %v1015 = vld [vmem:[%s4 + $0xb0] sm:$0xf]
  %v1016 = vld [vmem:[%s4 + $0xb4] sm:$0xf]
  %v1017 = vld [vmem:[%s4 + $0xb8] sm:$0xf]
  %v1018 = vld [vmem:[%s4 + $0xbc] sm:$0xf]
  %v1019 = vld [vmem:[%s4 + $0xc0] sm:$0xf]
  %v1020 = vld [vmem:[%s4 + $0xc4] sm:$0xf]
  %v1021 = vld [vmem:[%s4 + $0xc8] sm:$0xf]
  %v1022 = vld [vmem:[%s4 + $0xcc] sm:$0xf]
  %v1023 = vld [vmem:[%s4 + $0xd0] sm:$0xf]
  %v1024 = vld [vmem:[%s4 + $0xd4] sm:$0xf]
  %v1025 = vld [vmem:[%s4 + $0xd8] sm:$0xf]
  %v1026 = vld [vmem:[%s4 + $0xdc] sm:$0xf]
  %v1027 = vld [vmem:[%s4 + $0xe0] sm:$0xf]
  %v1028 = vld [vmem:[%s4 + $0xe4] sm:$0xf]
  %v1029 = vld [vmem:[%s4 + $0xe8] sm:$0xf]
  %v1030 = vld [vmem:[%s4 + $0xec] sm:$0xf]
  %v1031 = vld [vmem:[%s4 + $0xf0] sm:$0xf]
  %v1032 = vld [vmem:[%s4 + $0xf4] sm:$0xf]
  %v1033 = vld [vmem:[%s4 + $0xf8] sm:$0xf]
  %v1034 = vld [vmem:[%s4 + $0xfc] sm:$0xf]
  %v1035 = vperm.slane %v33, 5
  %v1100 = vunpack.c.l.b16 %v971
  %v1101 = vunpack.c.l.b16 %v972
  %v1102 = vunpack.c.l.b16 %v973
  %v1103 = vunpack.c.l.b16 %v974
  %v1104 = vunpack.c.l.b16 %v975
  %v1105 = vunpack.c.l.b16 %v976
  %v1106 = vunpack.c.l.b16 %v977
  %v1107 = vunpack.c.l.b16 %v978
  %v1108 = vunpack.c.l.b16 %v979
  %v1109 = vunpack.c.l.b16 %v980
  %v1110 = vunpack.c.l.b16 %v981
  %v1111 = vunpack.c.l.b16 %v982
  %v1112 = vunpack.c.l.b16 %v983
  %v1113 = vunpack.c.l.b16 %v984
  %v1114 = vunpack.c.l.b16 %v985
  %v1115 = vunpack.c.l.b16 %v986
  %v1116 = vunpack.c.l.b16 %v987
  %v1117 = vunpack.c.l.b16 %v988
  %v1118 = vunpack.c.l.b16 %v989
  %v1119 = vunpack.c.l.b16 %v990
  %v1120 = vunpack.c.l.b16 %v991
  %v1121 = vunpack.c.l.b16 %v992
  %v1122 = vunpack.c.l.b16 %v993
  %v1123 = vunpack.c.l.b16 %v994
  %v1124 = vunpack.c.l.b16 %v995
  %v1125 = vunpack.c.l.b16 %v996
  %v1126 = vunpack.c.l.b16 %v997
  %v1127 = vunpack.c.l.b16 %v998
  %v1128 = vunpack.c.l.b16 %v999
  %v1129 = vunpack.c.l.b16 %v1000
  %v1130 = vunpack.c.l.b16 %v1001
  %v1131 = vunpack.c.l.b16 %v1002
  %v1132 = vunpack.c.l.b16 %v1003
  %v1133 = vunpack.c.l.b16 %v1004
  %v1134 = vunpack.c.l.b16 %v1005
  %v1135 = vunpack.c.l.b16 %v1006
  %v1136 = vunpack.c.l.b16 %v1007
  %v1137 = vunpack.c.l.b16 %v1008
  %v1138 = vunpack.c.l.b16 %v1009
  %v1139 = vunpack.c.l.b16 %v1010
  %v1140 = vunpack.c.l.b16 %v1011
  %v1141 = vunpack.c.l.b16 %v1012
  %v1142 = vunpack.c.l.b16 %v1013
  %v1143 = vunpack.c.l.b16 %v1014
  %v1144 = vunpack.c.l.b16 %v1015
  %v1145 = vunpack.c.l.b16 %v1016
  %v1146 = vunpack.c.l.b16 %v1017
  %v1147 = vunpack.c.l.b16 %v1018
  %v1148 = vunpack.c.l.b16 %v1019
  %v1149 = vunpack.c.l.b16 %v1020
  %v1150 = vunpack.c.l.b16 %v1021
  %v1151 = vunpack.c.l.b16 %v1022
  %v1152 = vunpack.c.l.b16 %v1023
  %v1153 = vunpack.c.l.b16 %v1024
  %v1154 = vunpack.c.l.b16 %v1025
  %v1155 = vunpack.c.l.b16 %v1026
  %v1156 = vunpack.c.l.b16 %v1027
  %v1157 = vunpack.c.l.b16 %v1028
  %v1158 = vunpack.c.l.b16 %v1029
  %v1159 = vunpack.c.l.b16 %v1030
  %v1160 = vunpack.c.l.b16 %v1031
  %v1161 = vunpack.c.l.b16 %v1032
  %v1162 = vunpack.c.l.b16 %v1033
  %v1163 = vunpack.c.l.b16 %v1034
  %v1164 = vpack.c.b16 %v1101, %v1100
  %v1165 = vpack.c.b16 %v1103, %v1102
  %v1166 = vpack.c.b16 %v1105, %v1104
  %v1167 = vpack.c.b16 %v1107, %v1106
  %v1168 = vpack.c.b16 %v1109, %v1108
  %v1169 = vpack.c.b16 %v1111, %v1110
  %v1170 = vpack.c.b16 %v1113, %v1112
  %v1171 = vpack.c.b16 %v1115, %v1114
  %v1172 = vpack.c.b16 %v1117, %v1116
  %v1173 = vpack.c.b16 %v1119, %v1118
  %v1174 = vpack.c.b16 %v1121, %v1120
  %v1175 = vpack.c.b16 %v1123, %v1122
  %v1176 = vpack.c.b16 %v1125, %v1124
  %v1177 = vpack.c.b16 %v1127, %v1126
  %v1178 = vpack.c.b16 %v1129, %v1128
  %v1179 = vpack.c.b16 %v1131, %v1130
  %v1180 = vpack.c.b16 %v1133, %v1132
  %v1181 = vpack.c.b16 %v1135, %v1134
  %v1182 = vpack.c.b16 %v1137, %v1136
  %v1183 = vpack.c.b16 %v1139, %v1138
  %v1184 = vpack.c.b16 %v1141, %v1140
  %v1185 = vpack.c.b16 %v1143, %v1142
  %v1186 = vpack.c.b16 %v1145, %v1144
  %v1187 = vpack.c.b16 %v1147, %v1146
  %v1188 = vpack.c.b16 %v1149, %v1148
  %v1189 = vpack.c.b16 %v1151, %v1150
  %v1190 = vpack.c.b16 %v1153, %v1152
  %v1191 = vpack.c.b16 %v1155, %v1154
  %v1192 = vpack.c.b16 %v1157, %v1156
  %v1193 = vpack.c.b16 %v1159, %v1158
  %v1194 = vpack.c.b16 %v1161, %v1160
  %v1195 = vpack.c.b16 %v1163, %v1162
  %1228 = vmatpush.bf16.msra.mxu0 %v1171
  %1229 = vmatpush.bf16.msra.mxu0 %v1170
  %1230 = vmatpush.bf16.msra.mxu0 %v1169
  %1231 = vmatpush.bf16.msra.mxu0 %v1168
  %1232 = vmatpush.bf16.msra.mxu0 %v1167
  %1233 = vmatpush.bf16.msra.mxu0 %v1166
  %1234 = vmatpush.bf16.msra.mxu0 %v1165
  %1235 = vmatpush.bf16.msra.mxu0 %v1164
  %1236 = vmatmul.bf16.gmra.mxu0 %v951
  %v1237 = vpop.f32.mrf.mxu0
  %v1238 = vadd.f32 %v1035, %v1237
  %v1239 = vpop.f32.mrf.mxu0
  %v1240 = vadd.f32 %v1035, %v1239
  %1241 = vdwg.mxu0
  %1242 = vmatpush.bf16.msra.mxu0 %v1179
  %1243 = vmatpush.bf16.msra.mxu0 %v1178
  %1244 = vmatpush.bf16.msra.mxu0 %v1177
  %1245 = vmatpush.bf16.msra.mxu0 %v1176
  %1246 = vmatpush.bf16.msra.mxu0 %v1175
  %1247 = vmatpush.bf16.msra.mxu0 %v1174
  %1248 = vmatpush.bf16.msra.mxu0 %v1173
  %1249 = vmatpush.bf16.msra.mxu0 %v1172
  %1250 = vmatmul.bf16.gmra.mxu0 %v957
  %v1251 = vpop.f32.mrf.mxu0
  %v1252 = vadd.f32 %v1238, %v1251
  %v1253 = vpop.f32.mrf.mxu0
  %v1254 = vadd.f32 %v1240, %v1253
  %1255 = vdwg.mxu0
  %1256 = vmatpush.bf16.msra.mxu0 %v1187
  %1257 = vmatpush.bf16.msra.mxu0 %v1186
  %1258 = vmatpush.bf16.msra.mxu0 %v1185
  %1259 = vmatpush.bf16.msra.mxu0 %v1184
  %1260 = vmatpush.bf16.msra.mxu0 %v1183
  %1261 = vmatpush.bf16.msra.mxu0 %v1182
  %1262 = vmatpush.bf16.msra.mxu0 %v1181
  %1263 = vmatpush.bf16.msra.mxu0 %v1180
  %1264 = vmatmul.bf16.gmra.mxu0 %v963
  %v1265 = vpop.f32.mrf.mxu0
  %v1266 = vadd.f32 %v1252, %v1265
  %v1267 = vpop.f32.mrf.mxu0
  %v1268 = vadd.f32 %v1254, %v1267
  %1269 = vdwg.mxu0
  %1270 = vmatpush.bf16.msra.mxu0 %v1195
  %1271 = vmatpush.bf16.msra.mxu0 %v1194
  %1272 = vmatpush.bf16.msra.mxu0 %v1193
  %1273 = vmatpush.bf16.msra.mxu0 %v1192
  %1274 = vmatpush.bf16.msra.mxu0 %v1191
  %1275 = vmatpush.bf16.msra.mxu0 %v1190
  %1276 = vmatpush.bf16.msra.mxu0 %v1189
  %1277 = vmatpush.bf16.msra.mxu0 %v1188
  %1278 = vmatmul.bf16.gmra.mxu0 %v969
  %v1279 = vpop.f32.mrf.mxu0
  %v1280 = vadd.f32 %v1266, %v1279
  %v1281 = vpop.f32.mrf.mxu0
  %v1282 = vadd.f32 %v1268, %v1281
  %1283 = vdwg.mxu0
  %1284 = vst.msk [vmem:[%s9] sm:$0xff] %vm153, %v1280
  %1285 = vst.msk [vmem:[%s9 + $0x8] sm:$0xff] %vm153, %v1282
  // Predicated region
  $region38: #{block_forward.1} parent=0 // pred_check
    _
  $region39: #{block_forward.1} parent=0 // pred_check_branch
    %1287 = sbr.rel (0) target = $region41
  $region40: #{block_forward.1} parent=0 // pred_region
    _
  $region41: #{block_forward.1} parent=0 // pred_fallthru
    _
  // Predicated region
  $region42: #{block_forward.1} parent=0 // pred_check
    _
  $region43: #{block_forward.1} parent=0 // pred_check_branch
    %1289 = sbr.rel (0) target = $region45
  $region44: #{block_forward.1} parent=0 // pred_region
    _
  $region45: #{block_forward.1} parent=0 // pred_fallthru
    _

</llo_original>
